<compile_context>
chip_gen: v6e
topology: v6e:2x2x1
jax: 0.10.0
libtpu: 0.0.40
codegen_flags: <defaults>
</compile_context>

<pallas_src>
import functools

import jax
import jax.numpy as jnp
from jax.experimental import pallas as pl
from jax.experimental.pallas import tpu as pltpu


# ----------------------------------------------------------------------------
# Pallas kernel: fc1 + input projection (batched) -> unrolled GRU recurrence
#                -> batched fc2.
# ----------------------------------------------------------------------------
def _agent_net_kernel(
    x_ref,      # (N, input_size)
    h0_ref,     # (1, H)
    w1_ref,     # (input_size, 64)
    b1_ref,     # (1, 64)
    wih_ref,    # (64, 3H)   columns = [r | z | n]
    bu_ref,     # (1, 3H)    [bir+bhr | biz+bhz | bin]
    whh_ref,    # (H, 3H)    columns = [r | z | n]
    bhn_ref,    # (1, H)
    w2_ref,     # (H, output)
    b2_ref,     # (1, output)
    q_ref,      # OUT: (N, output)
    hout_ref,   # OUT: (1, H)
    h_scr,      # scratch VMEM: (N, H) per-step hidden states
):
  f32 = jnp.float32
  H = hout_ref.shape[-1]
  n_steps = q_ref.shape[0]

  # ---- hoisted, batched input-side work (2 matmuls total) ----
  fc1 = (jnp.dot(x_ref[...], w1_ref[...], preferred_element_type=f32)
         + b1_ref[...])                                        # (N, 64)
  u = (jnp.dot(fc1, wih_ref[...], preferred_element_type=f32)
       + bu_ref[...])                                          # (N, 3H)

  # Hoist loop-invariant loads.
  whh = whh_ref[...]                                           # (H, 3H)
  bhn = bhn_ref[...]                                           # (1, H)

  h = h0_ref[...].astype(f32)                                  # (1, H)

  # ---- serial GRU recurrence, fully unrolled (n_steps is a static int;
  #      for large N switch to lax.fori_loop(..., unroll=True)) ----
  for t in range(n_steps):
    u_t = u[t:t + 1, :]                                        # (1, 3H) static slice
    hw = jnp.dot(h, whh, preferred_element_type=f32)           # (1, 3H) single MXU op

    # Fused sigmoid over the concatenated r|z slice.
    rz = jax.nn.sigmoid(u_t[:, :2 * H] + hw[:, :2 * H])        # (1, 2H)
    r = rz[:, :H]
    z = rz[:, H:]
    n = jnp.tanh(u_t[:, 2 * H:] + r * (hw[:, 2 * H:] + bhn))   # (1, H)
    h = (1.0 - z) * n + z * h                                  # (1, H)

    h_scr[pl.ds(t, 1), :] = h                                  # static row store

  # ---- batched fc2: one lane-dense matmul + one store ----
  q_ref[...] = (jnp.dot(h_scr[...], w2_ref[...], preferred_element_type=f32)
                + b2_ref[...]).astype(q_ref.dtype)
  hout_ref[...] = h.astype(hout_ref.dtype)


# ----------------------------------------------------------------------------
# Wrapper: parameter packing (concat / bias pre-sum) + pallas_call.
# ----------------------------------------------------------------------------
@functools.partial(jax.jit, static_argnames=("output_size",))
def agent_net_forward(inputs, hidden_state, params, *, output_size):
  """inputs: (N, input_size) f32; hidden_state: (1, 1, hidden) f32."""
  n_seq, _ = inputs.shape
  hidden = hidden_state.shape[-1]
  h0 = hidden_state.reshape(1, hidden)

  # Concatenate gate weights (r, z, n) and pre-sum paired biases.
  wih_cat = jnp.concatenate(
      [params["wir_t"], params["wiz_t"], params["win_t"]], axis=1)   # (64, 3H)
  whh_cat = jnp.concatenate(
      [params["whr_t"], params["whz_t"], params["whn_t"]], axis=1)   # (H, 3H)
  bu = jnp.concatenate(
      [params["bir"] + params["bhr"],
       params["biz"] + params["bhz"],
       params["bin"]], axis=1)                                       # (1, 3H)

  vmem = pl.BlockSpec(memory_space=pltpu.MemorySpace.VMEM)
  kernel_args = (
      inputs, h0,
      params["w1_t"], params["b1"],
      wih_cat, bu, whh_cat, params["bhn"],
      params["w2_t"], params["b2"],
  )

  q_val, h_out = pl.pallas_call(
      _agent_net_kernel,
      out_shape=(
          jax.ShapeDtypeStruct((n_seq, output_size), jnp.float32),
          jax.ShapeDtypeStruct((1, hidden), jnp.float32),
      ),
      in_specs=[vmem] * len(kernel_args),
      out_specs=(vmem, vmem),
      scratch_shapes=[pltpu.VMEM((n_seq, hidden), jnp.float32)],
  )(*kernel_args)

  return q_val, h_out.reshape(1, 1, hidden)


# ----------------------------------------------------------------------------
# Deterministic parameter initialization (mimics PyTorch default uniform init).
# ----------------------------------------------------------------------------
def init_params(key, input_size, hidden_size, output_size):
  ks = jax.random.split(key, 16)

  def u(k, shape, fan_in):
    bound = 1.0 / jnp.sqrt(jnp.float32(fan_in))
    return jax.random.uniform(k, shape, jnp.float32, -bound, bound)

  H = hidden_size
  # fc1: Linear(input_size, 64) — stored transposed as (input_size, 64)
  w1_t = u(ks[0], (input_size, 64), input_size)
  b1 = u(ks[1], (1, 64), input_size)
  # GRU: weight_ih (3H, 64), weight_hh (3H, H), biases (3H,), gate order r,z,n
  w_ih = u(ks[2], (3 * H, 64), H)
  w_hh = u(ks[3], (3 * H, H), H)
  b_ih = u(ks[4], (1, 3 * H), H)
  b_hh = u(ks[5], (1, 3 * H), H)
  # fc2: Linear(H, output_size) — stored transposed as (H, output_size)
  w2_t = u(ks[6], (H, output_size), H)
  b2 = u(ks[7], (1, output_size), H)

  return dict(
      w1_t=w1_t, b1=b1,
      wir_t=w_ih[0 * H:1 * H].T, wiz_t=w_ih[1 * H:2 * H].T,
      win_t=w_ih[2 * H:3 * H].T,
      whr_t=w_hh[0 * H:1 * H].T, whz_t=w_hh[1 * H:2 * H].T,
      whn_t=w_hh[2 * H:3 * H].T,
      bir=b_ih[:, 0 * H:1 * H], biz=b_ih[:, 1 * H:2 * H],
      bin=b_ih[:, 2 * H:3 * H],
      bhr=b_hh[:, 0 * H:1 * H], bhz=b_hh[:, 1 * H:2 * H],
      bhn=b_hh[:, 2 * H:3 * H],
      w2_t=w2_t, b2=b2,
  )


# ----------------------------------------------------------------------------
# Pure-JAX reference (original per-gate math) for a correctness spot-check.
# ----------------------------------------------------------------------------
def reference_forward(inputs, hidden_state, params):
  fc1 = inputs @ params["w1_t"] + params["b1"]
  h = hidden_state.reshape(1, -1)
  hs = []
  for t in range(inputs.shape[0]):
    x_t = fc1[t:t + 1]
    r = jax.nn.sigmoid(x_t @ params["wir_t"] + params["bir"]
                       + h @ params["whr_t"] + params["bhr"])
    z = jax.nn.sigmoid(x_t @ params["wiz_t"] + params["biz"]
                       + h @ params["whz_t"] + params["bhz"])
    n = jnp.tanh(x_t @ params["win_t"] + params["bin"]
                 + r * (h @ params["whn_t"] + params["bhn"]))
    h = (1.0 - z) * n + z * h
    hs.append(h)
  gru_out = jnp.concatenate(hs, axis=0)
  q = gru_out @ params["w2_t"] + params["b2"]
  return q, h.reshape(1, 1, -1)


if __name__ == "__main__":
  input_size, hidden_size, output_size = 32, 32, 8
  n_seq = 8  # sequence length (the N axis the GRU recurs along)

  key = jax.random.PRNGKey(0)
  k_p, k_x, k_h = jax.random.split(key, 3)
  params = init_params(k_p, input_size, hidden_size, output_size)
  inputs = jax.random.normal(k_x, (n_seq, input_size), jnp.float32)
  hidden0 = jax.random.normal(k_h, (1, 1, hidden_size), jnp.float32)

  q_val, h_s = agent_net_forward(
      inputs, hidden0, params, output_size=output_size)
  q_val = jax.block_until_ready(q_val)
  h_s = jax.block_until_ready(h_s)

  q_ref, h_ref = reference_forward(inputs, hidden0, params)
  assert q_val.shape == (n_seq, output_size)
  assert h_s.shape == (1, 1, hidden_size)
  assert jnp.allclose(q_val, q_ref, atol=1e-4), "q_val mismatch"
  assert jnp.allclose(h_s, h_ref, atol=1e-4), "hidden mismatch"

  # TODO(synk): get_action's epsilon-greedy / numpy masking is host-side
  # control flow, intentionally not part of the kernel.
  print("KERNEL_OK")
</pallas_src>

<mosaic_0001>
module attributes {stable_mosaic.version = 11 : i64} {
  func.func @_agent_net_kernel(%arg0: memref<8x32xf32, #tpu.memory_space<vmem>>, %arg1: memref<1x32xf32, #tpu.memory_space<vmem>>, %arg2: memref<32x64xf32, #tpu.memory_space<vmem>>, %arg3: memref<1x64xf32, #tpu.memory_space<vmem>>, %arg4: memref<64x96xf32, #tpu.memory_space<vmem>>, %arg5: memref<1x96xf32, #tpu.memory_space<vmem>>, %arg6: memref<32x96xf32, #tpu.memory_space<vmem>>, %arg7: memref<1x32xf32, #tpu.memory_space<vmem>>, %arg8: memref<32x8xf32, #tpu.memory_space<vmem>>, %arg9: memref<1x8xf32, #tpu.memory_space<vmem>>, %arg10: memref<8x8xf32, #tpu.memory_space<vmem>>, %arg11: memref<1x32xf32, #tpu.memory_space<vmem>>, %arg12: memref<8x32xf32, #tpu.memory_space<vmem>>) attributes {dimension_semantics = [], scalar_prefetch = 0 : i64, scratch_operands = 1 : i64, tpu.core_type = #tpu.core_type<tc>} {
    %c0 = arith.constant 0 : index
    %c0_0 = arith.constant 0 : index
    %0 = vector.load %arg0[%c0, %c0_0] : memref<8x32xf32, #tpu.memory_space<vmem>>, vector<8x32xf32>
    %c0_1 = arith.constant 0 : index
    %c0_2 = arith.constant 0 : index
    %1 = vector.load %arg2[%c0_1, %c0_2] : memref<32x64xf32, #tpu.memory_space<vmem>>, vector<32x64xf32>
    %cst = arith.constant dense<0.000000e+00> : vector<8x64xf32>
    %2 = tpu.matmul %0, %1, %cst {dimension_numbers = #tpu.dot_dimension_numbers<[1], [0], [0], [1], [0, 0, 1, 1], [], []>} : vector<8x32xf32>, vector<32x64xf32>, vector<8x64xf32> -> vector<8x64xf32>
    %c0_3 = arith.constant 0 : index
    %c0_4 = arith.constant 0 : index
    %3 = vector.load %arg3[%c0_3, %c0_4] : memref<1x64xf32, #tpu.memory_space<vmem>>, vector<1x64xf32>
    %4 = vector.broadcast %3 : vector<1x64xf32> to vector<8x64xf32>
    %5 = arith.addf %2, %4 : vector<8x64xf32>
    %c0_5 = arith.constant 0 : index
    %c0_6 = arith.constant 0 : index
    %6 = vector.load %arg4[%c0_5, %c0_6] : memref<64x96xf32, #tpu.memory_space<vmem>>, vector<64x96xf32>
    %cst_7 = arith.constant dense<0.000000e+00> : vector<8x96xf32>
    %7 = tpu.matmul %5, %6, %cst_7 {dimension_numbers = #tpu.dot_dimension_numbers<[1], [0], [0], [1], [0, 0, 1, 1], [], []>} : vector<8x64xf32>, vector<64x96xf32>, vector<8x96xf32> -> vector<8x96xf32>
    %c0_8 = arith.constant 0 : index
    %c0_9 = arith.constant 0 : index
    %8 = vector.load %arg5[%c0_8, %c0_9] : memref<1x96xf32, #tpu.memory_space<vmem>>, vector<1x96xf32>
    %9 = vector.broadcast %8 : vector<1x96xf32> to vector<8x96xf32>
    %10 = arith.addf %7, %9 : vector<8x96xf32>
    %c0_10 = arith.constant 0 : index
    %c0_11 = arith.constant 0 : index
    %11 = vector.load %arg6[%c0_10, %c0_11] : memref<32x96xf32, #tpu.memory_space<vmem>>, vector<32x96xf32>
    %c0_12 = arith.constant 0 : index
    %c0_13 = arith.constant 0 : index
    %12 = vector.load %arg7[%c0_12, %c0_13] : memref<1x32xf32, #tpu.memory_space<vmem>>, vector<1x32xf32>
    %c0_14 = arith.constant 0 : index
    %c0_15 = arith.constant 0 : index
    %13 = vector.load %arg1[%c0_14, %c0_15] : memref<1x32xf32, #tpu.memory_space<vmem>>, vector<1x32xf32>
    %14 = vector.extract_strided_slice %10 {offsets = [0, 0], sizes = [1, 96], strides = [1, 1]} : vector<8x96xf32> to vector<1x96xf32>
    %cst_16 = arith.constant dense<0.000000e+00> : vector<1x96xf32>
    %15 = tpu.matmul %13, %11, %cst_16 {dimension_numbers = #tpu.dot_dimension_numbers<[1], [0], [0], [1], [0, 0, 1, 1], [], []>} : vector<1x32xf32>, vector<32x96xf32>, vector<1x96xf32> -> vector<1x96xf32>
    %16 = vector.extract_strided_slice %14 {offsets = [0, 0], sizes = [1, 64], strides = [1, 1]} : vector<1x96xf32> to vector<1x64xf32>
    %17 = vector.extract_strided_slice %15 {offsets = [0, 0], sizes = [1, 64], strides = [1, 1]} : vector<1x96xf32> to vector<1x64xf32>
    %18 = arith.addf %16, %17 : vector<1x64xf32>
    %19 = arith.negf %18 : vector<1x64xf32>
    %20 = math.exp %19 : vector<1x64xf32>
    %cst_17 = arith.constant 1.000000e+00 : f32
    %21 = vector.broadcast %cst_17 : f32 to vector<1x64xf32>
    %22 = arith.addf %21, %20 : vector<1x64xf32>
    %23 = arith.divf %21, %22 : vector<1x64xf32>
    %24 = vector.extract_strided_slice %23 {offsets = [0, 0], sizes = [1, 32], strides = [1, 1]} : vector<1x64xf32> to vector<1x32xf32>
    %25 = vector.extract_strided_slice %23 {offsets = [0, 32], sizes = [1, 32], strides = [1, 1]} : vector<1x64xf32> to vector<1x32xf32>
    %26 = vector.extract_strided_slice %14 {offsets = [0, 64], sizes = [1, 32], strides = [1, 1]} : vector<1x96xf32> to vector<1x32xf32>
    %27 = vector.extract_strided_slice %15 {offsets = [0, 64], sizes = [1, 32], strides = [1, 1]} : vector<1x96xf32> to vector<1x32xf32>
    %28 = arith.addf %27, %12 : vector<1x32xf32>
    %29 = arith.mulf %24, %28 : vector<1x32xf32>
    %30 = arith.addf %26, %29 : vector<1x32xf32>
    %31 = math.tanh %30 : vector<1x32xf32>
    %cst_18 = arith.constant 1.000000e+00 : f32
    %32 = vector.broadcast %cst_18 : f32 to vector<1x32xf32>
    %33 = arith.subf %32, %25 : vector<1x32xf32>
    %34 = arith.mulf %33, %31 : vector<1x32xf32>
    %35 = arith.mulf %25, %13 : vector<1x32xf32>
    %36 = arith.addf %34, %35 : vector<1x32xf32>
    %c0_19 = arith.constant 0 : index
    %c0_20 = arith.constant 0 : index
    %37 = vector.load %arg12[%c0_19, %c0_20] : memref<8x32xf32, #tpu.memory_space<vmem>>, vector<1x32xf32>
    tpu.vector_store %arg12[%c0_19, %c0_20], %36 {strides = array<i32>} : memref<8x32xf32, #tpu.memory_space<vmem>>, vector<1x32xf32>,
    %38 = vector.extract_strided_slice %10 {offsets = [1, 0], sizes = [1, 96], strides = [1, 1]} : vector<8x96xf32> to vector<1x96xf32>
    %cst_21 = arith.constant dense<0.000000e+00> : vector<1x96xf32>
    %39 = tpu.matmul %36, %11, %cst_21 {dimension_numbers = #tpu.dot_dimension_numbers<[1], [0], [0], [1], [0, 0, 1, 1], [], []>} : vector<1x32xf32>, vector<32x96xf32>, vector<1x96xf32> -> vector<1x96xf32>
    %40 = vector.extract_strided_slice %38 {offsets = [0, 0], sizes = [1, 64], strides = [1, 1]} : vector<1x96xf32> to vector<1x64xf32>
    %41 = vector.extract_strided_slice %39 {offsets = [0, 0], sizes = [1, 64], strides = [1, 1]} : vector<1x96xf32> to vector<1x64xf32>
    %42 = arith.addf %40, %41 : vector<1x64xf32>
    %43 = arith.negf %42 : vector<1x64xf32>
    %44 = math.exp %43 : vector<1x64xf32>
    %cst_22 = arith.constant 1.000000e+00 : f32
    %45 = vector.broadcast %cst_22 : f32 to vector<1x64xf32>
    %46 = arith.addf %45, %44 : vector<1x64xf32>
    %47 = arith.divf %45, %46 : vector<1x64xf32>
    %48 = vector.extract_strided_slice %47 {offsets = [0, 0], sizes = [1, 32], strides = [1, 1]} : vector<1x64xf32> to vector<1x32xf32>
    %49 = vector.extract_strided_slice %47 {offsets = [0, 32], sizes = [1, 32], strides = [1, 1]} : vector<1x64xf32> to vector<1x32xf32>
    %50 = vector.extract_strided_slice %38 {offsets = [0, 64], sizes = [1, 32], strides = [1, 1]} : vector<1x96xf32> to vector<1x32xf32>
    %51 = vector.extract_strided_slice %39 {offsets = [0, 64], sizes = [1, 32], strides = [1, 1]} : vector<1x96xf32> to vector<1x32xf32>
    %52 = arith.addf %51, %12 : vector<1x32xf32>
    %53 = arith.mulf %48, %52 : vector<1x32xf32>
    %54 = arith.addf %50, %53 : vector<1x32xf32>
    %55 = math.tanh %54 : vector<1x32xf32>
    %cst_23 = arith.constant 1.000000e+00 : f32
    %56 = vector.broadcast %cst_23 : f32 to vector<1x32xf32>
    %57 = arith.subf %56, %49 : vector<1x32xf32>
    %58 = arith.mulf %57, %55 : vector<1x32xf32>
    %59 = arith.mulf %49, %36 : vector<1x32xf32>
    %60 = arith.addf %58, %59 : vector<1x32xf32>
    %c1 = arith.constant 1 : index
    %c0_24 = arith.constant 0 : index
    %61 = vector.load %arg12[%c1, %c0_24] : memref<8x32xf32, #tpu.memory_space<vmem>>, vector<1x32xf32>
    tpu.vector_store %arg12[%c1, %c0_24], %60 {strides = array<i32>} : memref<8x32xf32, #tpu.memory_space<vmem>>, vector<1x32xf32>,
    %62 = vector.extract_strided_slice %10 {offsets = [2, 0], sizes = [1, 96], strides = [1, 1]} : vector<8x96xf32> to vector<1x96xf32>
    %cst_25 = arith.constant dense<0.000000e+00> : vector<1x96xf32>
    %63 = tpu.matmul %60, %11, %cst_25 {dimension_numbers = #tpu.dot_dimension_numbers<[1], [0], [0], [1], [0, 0, 1, 1], [], []>} : vector<1x32xf32>, vector<32x96xf32>, vector<1x96xf32> -> vector<1x96xf32>
    %64 = vector.extract_strided_slice %62 {offsets = [0, 0], sizes = [1, 64], strides = [1, 1]} : vector<1x96xf32> to vector<1x64xf32>
    %65 = vector.extract_strided_slice %63 {offsets = [0, 0], sizes = [1, 64], strides = [1, 1]} : vector<1x96xf32> to vector<1x64xf32>
    %66 = arith.addf %64, %65 : vector<1x64xf32>
    %67 = arith.negf %66 : vector<1x64xf32>
    %68 = math.exp %67 : vector<1x64xf32>
    %cst_26 = arith.constant 1.000000e+00 : f32
    %69 = vector.broadcast %cst_26 : f32 to vector<1x64xf32>
    %70 = arith.addf %69, %68 : vector<1x64xf32>
    %71 = arith.divf %69, %70 : vector<1x64xf32>
    %72 = vector.extract_strided_slice %71 {offsets = [0, 0], sizes = [1, 32], strides = [1, 1]} : vector<1x64xf32> to vector<1x32xf32>
    %73 = vector.extract_strided_slice %71 {offsets = [0, 32], sizes = [1, 32], strides = [1, 1]} : vector<1x64xf32> to vector<1x32xf32>
    %74 = vector.extract_strided_slice %62 {offsets = [0, 64], sizes = [1, 32], strides = [1, 1]} : vector<1x96xf32> to vector<1x32xf32>
    %75 = vector.extract_strided_slice %63 {offsets = [0, 64], sizes = [1, 32], strides = [1, 1]} : vector<1x96xf32> to vector<1x32xf32>
    %76 = arith.addf %75, %12 : vector<1x32xf32>
    %77 = arith.mulf %72, %76 : vector<1x32xf32>
    %78 = arith.addf %74, %77 : vector<1x32xf32>
    %79 = math.tanh %78 : vector<1x32xf32>
    %cst_27 = arith.constant 1.000000e+00 : f32
    %80 = vector.broadcast %cst_27 : f32 to vector<1x32xf32>
    %81 = arith.subf %80, %73 : vector<1x32xf32>
    %82 = arith.mulf %81, %79 : vector<1x32xf32>
    %83 = arith.mulf %73, %60 : vector<1x32xf32>
    %84 = arith.addf %82, %83 : vector<1x32xf32>
    %c2 = arith.constant 2 : index
    %c0_28 = arith.constant 0 : index
    %85 = vector.load %arg12[%c2, %c0_28] : memref<8x32xf32, #tpu.memory_space<vmem>>, vector<1x32xf32>
    tpu.vector_store %arg12[%c2, %c0_28], %84 {strides = array<i32>} : memref<8x32xf32, #tpu.memory_space<vmem>>, vector<1x32xf32>,
    %86 = vector.extract_strided_slice %10 {offsets = [3, 0], sizes = [1, 96], strides = [1, 1]} : vector<8x96xf32> to vector<1x96xf32>
    %cst_29 = arith.constant dense<0.000000e+00> : vector<1x96xf32>
    %87 = tpu.matmul %84, %11, %cst_29 {dimension_numbers = #tpu.dot_dimension_numbers<[1], [0], [0], [1], [0, 0, 1, 1], [], []>} : vector<1x32xf32>, vector<32x96xf32>, vector<1x96xf32> -> vector<1x96xf32>
    %88 = vector.extract_strided_slice %86 {offsets = [0, 0], sizes = [1, 64], strides = [1, 1]} : vector<1x96xf32> to vector<1x64xf32>
    %89 = vector.extract_strided_slice %87 {offsets = [0, 0], sizes = [1, 64], strides = [1, 1]} : vector<1x96xf32> to vector<1x64xf32>
    %90 = arith.addf %88, %89 : vector<1x64xf32>
    %91 = arith.negf %90 : vector<1x64xf32>
    %92 = math.exp %91 : vector<1x64xf32>
    %cst_30 = arith.constant 1.000000e+00 : f32
    %93 = vector.broadcast %cst_30 : f32 to vector<1x64xf32>
    %94 = arith.addf %93, %92 : vector<1x64xf32>
    %95 = arith.divf %93, %94 : vector<1x64xf32>
    %96 = vector.extract_strided_slice %95 {offsets = [0, 0], sizes = [1, 32], strides = [1, 1]} : vector<1x64xf32> to vector<1x32xf32>
    %97 = vector.extract_strided_slice %95 {offsets = [0, 32], sizes = [1, 32], strides = [1, 1]} : vector<1x64xf32> to vector<1x32xf32>
    %98 = vector.extract_strided_slice %86 {offsets = [0, 64], sizes = [1, 32], strides = [1, 1]} : vector<1x96xf32> to vector<1x32xf32>
    %99 = vector.extract_strided_slice %87 {offsets = [0, 64], sizes = [1, 32], strides = [1, 1]} : vector<1x96xf32> to vector<1x32xf32>
    %100 = arith.addf %99, %12 : vector<1x32xf32>
    %101 = arith.mulf %96, %100 : vector<1x32xf32>
    %102 = arith.addf %98, %101 : vector<1x32xf32>
    %103 = math.tanh %102 : vector<1x32xf32>
    %cst_31 = arith.constant 1.000000e+00 : f32
    %104 = vector.broadcast %cst_31 : f32 to vector<1x32xf32>
    %105 = arith.subf %104, %97 : vector<1x32xf32>
    %106 = arith.mulf %105, %103 : vector<1x32xf32>
    %107 = arith.mulf %97, %84 : vector<1x32xf32>
    %108 = arith.addf %106, %107 : vector<1x32xf32>
    %c3 = arith.constant 3 : index
    %c0_32 = arith.constant 0 : index
    %109 = vector.load %arg12[%c3, %c0_32] : memref<8x32xf32, #tpu.memory_space<vmem>>, vector<1x32xf32>
    tpu.vector_store %arg12[%c3, %c0_32], %108 {strides = array<i32>} : memref<8x32xf32, #tpu.memory_space<vmem>>, vector<1x32xf32>,
    %110 = vector.extract_strided_slice %10 {offsets = [4, 0], sizes = [1, 96], strides = [1, 1]} : vector<8x96xf32> to vector<1x96xf32>
    %cst_33 = arith.constant dense<0.000000e+00> : vector<1x96xf32>
    %111 = tpu.matmul %108, %11, %cst_33 {dimension_numbers = #tpu.dot_dimension_numbers<[1], [0], [0], [1], [0, 0, 1, 1], [], []>} : vector<1x32xf32>, vector<32x96xf32>, vector<1x96xf32> -> vector<1x96xf32>
    %112 = vector.extract_strided_slice %110 {offsets = [0, 0], sizes = [1, 64], strides = [1, 1]} : vector<1x96xf32> to vector<1x64xf32>
    %113 = vector.extract_strided_slice %111 {offsets = [0, 0], sizes = [1, 64], strides = [1, 1]} : vector<1x96xf32> to vector<1x64xf32>
    %114 = arith.addf %112, %113 : vector<1x64xf32>
    %115 = arith.negf %114 : vector<1x64xf32>
    %116 = math.exp %115 : vector<1x64xf32>
    %cst_34 = arith.constant 1.000000e+00 : f32
    %117 = vector.broadcast %cst_34 : f32 to vector<1x64xf32>
    %118 = arith.addf %117, %116 : vector<1x64xf32>
    %119 = arith.divf %117, %118 : vector<1x64xf32>
    %120 = vector.extract_strided_slice %119 {offsets = [0, 0], sizes = [1, 32], strides = [1, 1]} : vector<1x64xf32> to vector<1x32xf32>
    %121 = vector.extract_strided_slice %119 {offsets = [0, 32], sizes = [1, 32], strides = [1, 1]} : vector<1x64xf32> to vector<1x32xf32>
    %122 = vector.extract_strided_slice %110 {offsets = [0, 64], sizes = [1, 32], strides = [1, 1]} : vector<1x96xf32> to vector<1x32xf32>
    %123 = vector.extract_strided_slice %111 {offsets = [0, 64], sizes = [1, 32], strides = [1, 1]} : vector<1x96xf32> to vector<1x32xf32>
    %124 = arith.addf %123, %12 : vector<1x32xf32>
    %125 = arith.mulf %120, %124 : vector<1x32xf32>
    %126 = arith.addf %122, %125 : vector<1x32xf32>
    %127 = math.tanh %126 : vector<1x32xf32>
    %cst_35 = arith.constant 1.000000e+00 : f32
    %128 = vector.broadcast %cst_35 : f32 to vector<1x32xf32>
    %129 = arith.subf %128, %121 : vector<1x32xf32>
    %130 = arith.mulf %129, %127 : vector<1x32xf32>
    %131 = arith.mulf %121, %108 : vector<1x32xf32>
    %132 = arith.addf %130, %131 : vector<1x32xf32>
    %c4 = arith.constant 4 : index
    %c0_36 = arith.constant 0 : index
    %133 = vector.load %arg12[%c4, %c0_36] : memref<8x32xf32, #tpu.memory_space<vmem>>, vector<1x32xf32>
    tpu.vector_store %arg12[%c4, %c0_36], %132 {strides = array<i32>} : memref<8x32xf32, #tpu.memory_space<vmem>>, vector<1x32xf32>,
    %134 = vector.extract_strided_slice %10 {offsets = [5, 0], sizes = [1, 96], strides = [1, 1]} : vector<8x96xf32> to vector<1x96xf32>
    %cst_37 = arith.constant dense<0.000000e+00> : vector<1x96xf32>
    %135 = tpu.matmul %132, %11, %cst_37 {dimension_numbers = #tpu.dot_dimension_numbers<[1], [0], [0], [1], [0, 0, 1, 1], [], []>} : vector<1x32xf32>, vector<32x96xf32>, vector<1x96xf32> -> vector<1x96xf32>
    %136 = vector.extract_strided_slice %134 {offsets = [0, 0], sizes = [1, 64], strides = [1, 1]} : vector<1x96xf32> to vector<1x64xf32>
    %137 = vector.extract_strided_slice %135 {offsets = [0, 0], sizes = [1, 64], strides = [1, 1]} : vector<1x96xf32> to vector<1x64xf32>
    %138 = arith.addf %136, %137 : vector<1x64xf32>
    %139 = arith.negf %138 : vector<1x64xf32>
    %140 = math.exp %139 : vector<1x64xf32>
    %cst_38 = arith.constant 1.000000e+00 : f32
    %141 = vector.broadcast %cst_38 : f32 to vector<1x64xf32>
    %142 = arith.addf %141, %140 : vector<1x64xf32>
    %143 = arith.divf %141, %142 : vector<1x64xf32>
    %144 = vector.extract_strided_slice %143 {offsets = [0, 0], sizes = [1, 32], strides = [1, 1]} : vector<1x64xf32> to vector<1x32xf32>
    %145 = vector.extract_strided_slice %143 {offsets = [0, 32], sizes = [1, 32], strides = [1, 1]} : vector<1x64xf32> to vector<1x32xf32>
    %146 = vector.extract_strided_slice %134 {offsets = [0, 64], sizes = [1, 32], strides = [1, 1]} : vector<1x96xf32> to vector<1x32xf32>
    %147 = vector.extract_strided_slice %135 {offsets = [0, 64], sizes = [1, 32], strides = [1, 1]} : vector<1x96xf32> to vector<1x32xf32>
    %148 = arith.addf %147, %12 : vector<1x32xf32>
    %149 = arith.mulf %144, %148 : vector<1x32xf32>
    %150 = arith.addf %146, %149 : vector<1x32xf32>
    %151 = math.tanh %150 : vector<1x32xf32>
    %cst_39 = arith.constant 1.000000e+00 : f32
    %152 = vector.broadcast %cst_39 : f32 to vector<1x32xf32>
    %153 = arith.subf %152, %145 : vector<1x32xf32>
    %154 = arith.mulf %153, %151 : vector<1x32xf32>
    %155 = arith.mulf %145, %132 : vector<1x32xf32>
    %156 = arith.addf %154, %155 : vector<1x32xf32>
    %c5 = arith.constant 5 : index
    %c0_40 = arith.constant 0 : index
    %157 = vector.load %arg12[%c5, %c0_40] : memref<8x32xf32, #tpu.memory_space<vmem>>, vector<1x32xf32>
    tpu.vector_store %arg12[%c5, %c0_40], %156 {strides = array<i32>} : memref<8x32xf32, #tpu.memory_space<vmem>>, vector<1x32xf32>,
    %158 = vector.extract_strided_slice %10 {offsets = [6, 0], sizes = [1, 96], strides = [1, 1]} : vector<8x96xf32> to vector<1x96xf32>
    %cst_41 = arith.constant dense<0.000000e+00> : vector<1x96xf32>
    %159 = tpu.matmul %156, %11, %cst_41 {dimension_numbers = #tpu.dot_dimension_numbers<[1], [0], [0], [1], [0, 0, 1, 1], [], []>} : vector<1x32xf32>, vector<32x96xf32>, vector<1x96xf32> -> vector<1x96xf32>
    %160 = vector.extract_strided_slice %158 {offsets = [0, 0], sizes = [1, 64], strides = [1, 1]} : vector<1x96xf32> to vector<1x64xf32>
    %161 = vector.extract_strided_slice %159 {offsets = [0, 0], sizes = [1, 64], strides = [1, 1]} : vector<1x96xf32> to vector<1x64xf32>
    %162 = arith.addf %160, %161 : vector<1x64xf32>
    %163 = arith.negf %162 : vector<1x64xf32>
    %164 = math.exp %163 : vector<1x64xf32>
    %cst_42 = arith.constant 1.000000e+00 : f32
    %165 = vector.broadcast %cst_42 : f32 to vector<1x64xf32>
    %166 = arith.addf %165, %164 : vector<1x64xf32>
    %167 = arith.divf %165, %166 : vector<1x64xf32>
    %168 = vector.extract_strided_slice %167 {offsets = [0, 0], sizes = [1, 32], strides = [1, 1]} : vector<1x64xf32> to vector<1x32xf32>
    %169 = vector.extract_strided_slice %167 {offsets = [0, 32], sizes = [1, 32], strides = [1, 1]} : vector<1x64xf32> to vector<1x32xf32>
    %170 = vector.extract_strided_slice %158 {offsets = [0, 64], sizes = [1, 32], strides = [1, 1]} : vector<1x96xf32> to vector<1x32xf32>
    %171 = vector.extract_strided_slice %159 {offsets = [0, 64], sizes = [1, 32], strides = [1, 1]} : vector<1x96xf32> to vector<1x32xf32>
    %172 = arith.addf %171, %12 : vector<1x32xf32>
    %173 = arith.mulf %168, %172 : vector<1x32xf32>
    %174 = arith.addf %170, %173 : vector<1x32xf32>
    %175 = math.tanh %174 : vector<1x32xf32>
    %cst_43 = arith.constant 1.000000e+00 : f32
    %176 = vector.broadcast %cst_43 : f32 to vector<1x32xf32>
    %177 = arith.subf %176, %169 : vector<1x32xf32>
    %178 = arith.mulf %177, %175 : vector<1x32xf32>
    %179 = arith.mulf %169, %156 : vector<1x32xf32>
    %180 = arith.addf %178, %179 : vector<1x32xf32>
    %c6 = arith.constant 6 : index
    %c0_44 = arith.constant 0 : index
    %181 = vector.load %arg12[%c6, %c0_44] : memref<8x32xf32, #tpu.memory_space<vmem>>, vector<1x32xf32>
    tpu.vector_store %arg12[%c6, %c0_44], %180 {strides = array<i32>} : memref<8x32xf32, #tpu.memory_space<vmem>>, vector<1x32xf32>,
    %182 = vector.extract_strided_slice %10 {offsets = [7, 0], sizes = [1, 96], strides = [1, 1]} : vector<8x96xf32> to vector<1x96xf32>
    %cst_45 = arith.constant dense<0.000000e+00> : vector<1x96xf32>
    %183 = tpu.matmul %180, %11, %cst_45 {dimension_numbers = #tpu.dot_dimension_numbers<[1], [0], [0], [1], [0, 0, 1, 1], [], []>} : vector<1x32xf32>, vector<32x96xf32>, vector<1x96xf32> -> vector<1x96xf32>
    %184 = vector.extract_strided_slice %182 {offsets = [0, 0], sizes = [1, 64], strides = [1, 1]} : vector<1x96xf32> to vector<1x64xf32>
    %185 = vector.extract_strided_slice %183 {offsets = [0, 0], sizes = [1, 64], strides = [1, 1]} : vector<1x96xf32> to vector<1x64xf32>
    %186 = arith.addf %184, %185 : vector<1x64xf32>
    %187 = arith.negf %186 : vector<1x64xf32>
    %188 = math.exp %187 : vector<1x64xf32>
    %cst_46 = arith.constant 1.000000e+00 : f32
    %189 = vector.broadcast %cst_46 : f32 to vector<1x64xf32>
    %190 = arith.addf %189, %188 : vector<1x64xf32>
    %191 = arith.divf %189, %190 : vector<1x64xf32>
    %192 = vector.extract_strided_slice %191 {offsets = [0, 0], sizes = [1, 32], strides = [1, 1]} : vector<1x64xf32> to vector<1x32xf32>
    %193 = vector.extract_strided_slice %191 {offsets = [0, 32], sizes = [1, 32], strides = [1, 1]} : vector<1x64xf32> to vector<1x32xf32>
    %194 = vector.extract_strided_slice %182 {offsets = [0, 64], sizes = [1, 32], strides = [1, 1]} : vector<1x96xf32> to vector<1x32xf32>
    %195 = vector.extract_strided_slice %183 {offsets = [0, 64], sizes = [1, 32], strides = [1, 1]} : vector<1x96xf32> to vector<1x32xf32>
    %196 = arith.addf %195, %12 : vector<1x32xf32>
    %197 = arith.mulf %192, %196 : vector<1x32xf32>
    %198 = arith.addf %194, %197 : vector<1x32xf32>
    %199 = math.tanh %198 : vector<1x32xf32>
    %cst_47 = arith.constant 1.000000e+00 : f32
    %200 = vector.broadcast %cst_47 : f32 to vector<1x32xf32>
    %201 = arith.subf %200, %193 : vector<1x32xf32>
    %202 = arith.mulf %201, %199 : vector<1x32xf32>
    %203 = arith.mulf %193, %180 : vector<1x32xf32>
    %204 = arith.addf %202, %203 : vector<1x32xf32>
    %c7 = arith.constant 7 : index
    %c0_48 = arith.constant 0 : index
    %205 = vector.load %arg12[%c7, %c0_48] : memref<8x32xf32, #tpu.memory_space<vmem>>, vector<1x32xf32>
    tpu.vector_store %arg12[%c7, %c0_48], %204 {strides = array<i32>} : memref<8x32xf32, #tpu.memory_space<vmem>>, vector<1x32xf32>,
    %c0_49 = arith.constant 0 : index
    %c0_50 = arith.constant 0 : index
    %206 = vector.load %arg12[%c0_49, %c0_50] : memref<8x32xf32, #tpu.memory_space<vmem>>, vector<8x32xf32>
    %c0_51 = arith.constant 0 : index
    %c0_52 = arith.constant 0 : index
    %207 = vector.load %arg8[%c0_51, %c0_52] : memref<32x8xf32, #tpu.memory_space<vmem>>, vector<32x8xf32>
    %cst_53 = arith.constant dense<0.000000e+00> : vector<8x8xf32>
    %208 = tpu.matmul %206, %207, %cst_53 {dimension_numbers = #tpu.dot_dimension_numbers<[1], [0], [0], [1], [0, 0, 1, 1], [], []>} : vector<8x32xf32>, vector<32x8xf32>, vector<8x8xf32> -> vector<8x8xf32>
    %c0_54 = arith.constant 0 : index
    %c0_55 = arith.constant 0 : index
    %209 = vector.load %arg9[%c0_54, %c0_55] : memref<1x8xf32, #tpu.memory_space<vmem>>, vector<1x8xf32>
    %210 = vector.broadcast %209 : vector<1x8xf32> to vector<8x8xf32>
    %211 = arith.addf %208, %210 : vector<8x8xf32>
    %c0_56 = arith.constant 0 : index
    %c0_57 = arith.constant 0 : index
    %212 = vector.load %arg10[%c0_56, %c0_57] : memref<8x8xf32, #tpu.memory_space<vmem>>, vector<8x8xf32>
    tpu.vector_store %arg10[%c0_56, %c0_57], %211 {strides = array<i32>} : memref<8x8xf32, #tpu.memory_space<vmem>>, vector<8x8xf32>,
    %c0_58 = arith.constant 0 : index
    %c0_59 = arith.constant 0 : index
    %213 = vector.load %arg11[%c0_58, %c0_59] : memref<1x32xf32, #tpu.memory_space<vmem>>, vector<1x32xf32>
    tpu.vector_store %arg11[%c0_58, %c0_59], %204 {strides = array<i32>} : memref<1x32xf32, #tpu.memory_space<vmem>>, vector<1x32xf32>,
    return
  }
}

</mosaic_0001>

<llo_original>
// kernel: agent_net_forward.1
$region0: #{agent_net_forward.1}
  #allocation0 [shape = 'u32[]', space=smem, size = 0x4, offset = 0x4, fixed_abs, tag = 'smem constant byte address 0x4 - core index']
  #allocation1 [shape = 'u32[144,128]{1,0:T(1,128)}', space=vmem, size = 0x12000, scoped, tag = 'internal scratch']
  #allocation2 [shape = 'f32[8,32]{1,0:T(8,128)}', space=vmem, size = 0x1000, scoped, tag = 'scratch operand']
  %s0 = inlined_call_operand.vmem [shape: f32[8,32], index: 0, kind: input, shape index: {}]
  %s1 = inlined_call_operand.vmem [shape: f32[1,32], index: 1, kind: input, shape index: {}]
  %s2 = inlined_call_operand.vmem [shape: f32[32,64], index: 2, kind: input, shape index: {}]
  %s3 = inlined_call_operand.vmem [shape: f32[1,64], index: 3, kind: input, shape index: {}]
  %s4 = inlined_call_operand.vmem [shape: f32[64,96], index: 4, kind: input, shape index: {}]
  %s5 = inlined_call_operand.vmem [shape: f32[1,96], index: 5, kind: input, shape index: {}]
  %s6 = inlined_call_operand.vmem [shape: f32[32,96], index: 6, kind: input, shape index: {}]
  %s7 = inlined_call_operand.vmem [shape: f32[1,32], index: 7, kind: input, shape index: {}]
  %s8 = inlined_call_operand.vmem [shape: f32[32,8], index: 8, kind: input, shape index: {}]
  %s9 = inlined_call_operand.vmem [shape: f32[1,8], index: 9, kind: input, shape index: {}]
  %s10 = inlined_call_operand.hbm [shape: f32[8,8], index: 10, kind: output, shape index: {0}]
  %s11 = inlined_call_operand.hbm [shape: f32[1,32], index: 11, kind: output, shape index: {1}]
  %12 = xla_tuple %s10, %s11
  %s13 = sld [smem:[#allocation0]]
  $region58: #{agent_net_forward.1} parent=0
    _
  %s15 = ssub.s32 1, %s13
  %s16 = scalar_select 0, %s15, %s13
  $region1: #{agent_net_forward.1} parent=0
    #allocation3 [shape = 'u8[4096]{0}', space=vmem, size = 0x1000, scoped, tag = 'output window, operand 0, single buffered']
    #allocation4 [shape = 's32[1]{0}', space=sflag, size = 0x4, scoped, tag = 'scoped memory for agent_net_forward.1']
    #allocation5 [shape = 'u8[512]{0}', space=vmem, size = 0x400, scoped, tag = 'output window, operand 1, single buffered']
    #allocation6 [shape = 's32[1]{0}', space=sflag, size = 0x4, scoped, tag = 'scoped memory for agent_net_forward.1']
    %17 = vsyncpa [#allocation4], 0
    %18 = vsyncpa [#allocation6], 0
    // Predicated region
    $region2: #{agent_net_forward.1} parent=1 // pred_check
      _
    $region3: #{agent_net_forward.1} parent=1 // pred_check_branch
      %20 = sbr.rel (0) target = $region5
    $region4: #{agent_net_forward.1} parent=1 // pred_region
      _
    $region5: #{agent_net_forward.1} parent=1 // pred_fallthru
      _
    // Predicated region
    $region6: #{agent_net_forward.1} parent=1 // pred_check
      _
    $region7: #{agent_net_forward.1} parent=1 // pred_check_branch
      %22 = sbr.rel (0) target = $region9
    $region8: #{agent_net_forward.1} parent=1 // pred_region
      _
    $region9: #{agent_net_forward.1} parent=1 // pred_fallthru
      _
    // Predicated region
    $region10: #{agent_net_forward.1} parent=1 // pred_check
      _
    $region11: #{agent_net_forward.1} parent=1 // pred_check_branch
      %24 = sbr.rel (0) target = $region13
    $region12: #{agent_net_forward.1} parent=1 // pred_region
      _
    $region13: #{agent_net_forward.1} parent=1 // pred_fallthru
      _
    // Predicated region
    $region14: #{agent_net_forward.1} parent=1 // pred_check
      _
    $region15: #{agent_net_forward.1} parent=1 // pred_check_branch
      %26 = sbr.rel (0) target = $region17
    $region16: #{agent_net_forward.1} parent=1 // pred_region
      _
    $region17: #{agent_net_forward.1} parent=1 // pred_fallthru
      _
    // Predicated region
    $region18: #{agent_net_forward.1} parent=1 // pred_check
      _
    $region19: #{agent_net_forward.1} parent=1 // pred_check_branch
      %28 = sbr.rel (0) target = $region21
    $region20: #{agent_net_forward.1} parent=1 // pred_region
      _
    $region21: #{agent_net_forward.1} parent=1 // pred_fallthru
      _
    // Predicated region
    $region22: #{agent_net_forward.1} parent=1 // pred_check
      _
    $region23: #{agent_net_forward.1} parent=1 // pred_check_branch
      %30 = sbr.rel (0) target = $region25
    $region24: #{agent_net_forward.1} parent=1 // pred_region
      _
    $region25: #{agent_net_forward.1} parent=1 // pred_fallthru
      _
    // Predicated region
    $region26: #{agent_net_forward.1} parent=1 // pred_check
      _
    $region27: #{agent_net_forward.1} parent=1 // pred_check_branch
      %32 = sbr.rel (0) target = $region29
    $region28: #{agent_net_forward.1} parent=1 // pred_region
      _
    $region29: #{agent_net_forward.1} parent=1 // pred_fallthru
      _
    // Predicated region
    $region30: #{agent_net_forward.1} parent=1 // pred_check
      _
    $region31: #{agent_net_forward.1} parent=1 // pred_check_branch
      %34 = sbr.rel (0) target = $region33
    $region32: #{agent_net_forward.1} parent=1 // pred_region
      _
    $region33: #{agent_net_forward.1} parent=1 // pred_fallthru
      _
    // Predicated region
    $region34: #{agent_net_forward.1} parent=1 // pred_check
      _
    $region35: #{agent_net_forward.1} parent=1 // pred_check_branch
      %36 = sbr.rel (0) target = $region37
    $region36: #{agent_net_forward.1} parent=1 // pred_region
      _
    $region37: #{agent_net_forward.1} parent=1 // pred_fallthru
      _
    // Predicated region
    $region38: #{agent_net_forward.1} parent=1 // pred_check
      _
    $region39: #{agent_net_forward.1} parent=1 // pred_check_branch
      %38 = sbr.rel (0) target = $region41
    $region40: #{agent_net_forward.1} parent=1 // pred_region
      _
    $region41: #{agent_net_forward.1} parent=1 // pred_fallthru
      _
    %v39 = vld [vmem:[%s0] sm:$0xff]
    %v40 = vld [vmem:[%s2] sm:$0xff]
    %v41 = vld [vmem:[%s2 + $0x8] sm:$0xff]
    %v42 = vld [vmem:[%s2 + $0x10] sm:$0xff]
    %v43 = vld [vmem:[%s2 + $0x18] sm:$0xff]
    %v44 = vld [vmem:[%s3] sm:$0x1]
    %v46 = vlaneseq
    %v47 = vshrl.u32 %v46, 7
    %v48 = vsub.s32 0, %v47
    %v49 = vrot.slane %v44, %v48
    %vm51 = vcmask 261120
    %v53 = vsel %vm51, %v39, 0
    %55 = vmatprep.subr.mxu0 0.0
    %56 = vmatpush1.msra.mxu0 0.0
    %57 = vmatprep.subr.mxu0 0.0
    %58 = vmatpush1.msra.mxu0 0.0
    %59 = vmatprep.subr.mxu0 0.0
    %60 = vmatpush1.msra.mxu0 0.0
    %61 = vmatprep.subr.mxu0 0.0
    %62 = vmatpush1.msra.mxu0 0.0
    %63 = vmatprep.subr.mxu0 0.0
    %64 = vmatpush1.msra.mxu0 0.0
    %65 = vmatprep.subr.mxu0 0.0
    %66 = vmatpush1.msra.mxu0 0.0
    %67 = vmatprep.subr.mxu0 0.0
    %68 = vmatpush1.msra.mxu0 0.0
    %69 = vmatprep.subr.mxu0 0.0
    %70 = vmatpush1.msra.mxu0 0.0
    %71 = vmatprep.subr.mxu0 0.0
    %72 = vmatpush1.msra.mxu0 0.0
    %73 = vmatprep.subr.mxu0 0.0
    %74 = vmatpush1.msra.mxu0 0.0
    %75 = vmatprep.subr.mxu0 0.0
    %76 = vmatpush1.msra.mxu0 0.0
    %77 = vmatprep.subr.mxu0 0.0
    %78 = vmatpush1.msra.mxu0 0.0
    %79 = vmatprep.subr.mxu0 0.0
    %80 = vmatpush1.msra.mxu0 %v43
    %81 = vmatprep.subr.mxu0 0.0
    %82 = vmatpush1.msra.mxu0 %v42
    %83 = vmatprep.subr.mxu0 0.0
    %84 = vmatpush1.msra.mxu0 %v41
    %85 = vmatprep.subr.mxu0 0.0
    %86 = vmatpush1.msra.mxu0 %v40
    %87 = vmatprep.subr.mxu0 0.0
    %88 = vmatpush2.msra.mxu0 0.0
    %89 = vmatprep.subr.mxu0 0.0
    %90 = vmatpush2.msra.mxu0 0.0
    %91 = vmatprep.subr.mxu0 0.0
    %92 = vmatpush2.msra.mxu0 0.0
    %93 = vmatprep.subr.mxu0 0.0
    %94 = vmatpush2.msra.mxu0 0.0
    %95 = vmatprep.subr.mxu0 0.0
    %96 = vmatpush2.msra.mxu0 0.0
    %97 = vmatprep.subr.mxu0 0.0
    %98 = vmatpush2.msra.mxu0 0.0
    %99 = vmatprep.subr.mxu0 0.0
    %100 = vmatpush2.msra.mxu0 0.0
    %101 = vmatprep.subr.mxu0 0.0
    %102 = vmatpush2.msra.mxu0 0.0
    %103 = vmatprep.subr.mxu0 0.0
    %104 = vmatpush2.msra.mxu0 0.0
    %105 = vmatprep.subr.mxu0 0.0
    %106 = vmatpush2.msra.mxu0 0.0
    %107 = vmatprep.subr.mxu0 0.0
    %108 = vmatpush2.msra.mxu0 0.0
    %109 = vmatprep.subr.mxu0 0.0
    %110 = vmatpush2.msra.mxu0 0.0
    %111 = vmatprep.subr.mxu0 0.0
    %112 = vmatpush2.msra.mxu0 0.0
    %113 = vmatprep.subr.mxu0 0.0
    %114 = vmatpush2.msra.mxu0 0.0
    %115 = vmatprep.subr.mxu0 0.0
    %116 = vmatpush2.msra.mxu0 0.0
    %117 = vmatprep.subr.mxu0 0.0
    %118 = vmatpush2.msra.mxu0 0.0
    %119 = vmatprep.mubr.f32.mxu0 0.0
    %120 = vmatmul.mubr.f32.gmra.mxu0 %v53
    %v121 = vpop.f32.mrf.mxu0
    %v122 = vadd.f32 %v49, %v121
    %v123 = vpop.f32.mrf.mxu0
    %124 = vdwg.mxu0
    %v125 = vld [vmem:[%s4] sm:$0xff]
    %v126 = vld [vmem:[%s4 + $0x8] sm:$0xff]
    %v127 = vld [vmem:[%s4 + $0x10] sm:$0xff]
    %v128 = vld [vmem:[%s4 + $0x18] sm:$0xff]
    %v129 = vld [vmem:[%s4 + $0x20] sm:$0xff]
    %v130 = vld [vmem:[%s4 + $0x28] sm:$0xff]
    %v131 = vld [vmem:[%s4 + $0x30] sm:$0xff]
    %v132 = vld [vmem:[%s4 + $0x38] sm:$0xff]
    %v133 = vld [vmem:[%s5] sm:$0x1]
    %v135 = vlaneseq
    %v136 = vshrl.u32 %v135, 7
    %v137 = vsub.s32 0, %v136
    %v138 = vrot.slane %v133, %v137
    %vm140 = vcmask 523264
    %v142 = vsel %vm140, %v122, 0
    %144 = vmatprep.subr.mxu0 0.0
    %145 = vmatpush1.msra.mxu0 0.0
    %146 = vmatprep.subr.mxu0 0.0
    %147 = vmatpush1.msra.mxu0 0.0
    %148 = vmatprep.subr.mxu0 0.0
    %149 = vmatpush1.msra.mxu0 0.0
    %150 = vmatprep.subr.mxu0 0.0
    %151 = vmatpush1.msra.mxu0 0.0
    %152 = vmatprep.subr.mxu0 0.0
    %153 = vmatpush1.msra.mxu0 0.0
    %154 = vmatprep.subr.mxu0 0.0
    %155 = vmatpush1.msra.mxu0 0.0
    %156 = vmatprep.subr.mxu0 0.0
    %157 = vmatpush1.msra.mxu0 0.0
    %158 = vmatprep.subr.mxu0 0.0
    %159 = vmatpush1.msra.mxu0 0.0
    %160 = vmatprep.subr.mxu0 0.0
    %161 = vmatpush1.msra.mxu0 %v132
    %162 = vmatprep.subr.mxu0 0.0
    %163 = vmatpush1.msra.mxu0 %v131
    %164 = vmatprep.subr.mxu0 0.0
    %165 = vmatpush1.msra.mxu0 %v130
    %166 = vmatprep.subr.mxu0 0.0
    %167 = vmatpush1.msra.mxu0 %v129
    %168 = vmatprep.subr.mxu0 0.0
    %169 = vmatpush1.msra.mxu0 %v128
    %170 = vmatprep.subr.mxu0 0.0
    %171 = vmatpush1.msra.mxu0 %v127
    %172 = vmatprep.subr.mxu0 0.0
    %173 = vmatpush1.msra.mxu0 %v126
    %174 = vmatprep.subr.mxu0 0.0
    %175 = vmatpush1.msra.mxu0 %v125
    %176 = vmatprep.subr.mxu0 0.0
    %177 = vmatpush2.msra.mxu0 0.0
    %178 = vmatprep.subr.mxu0 0.0
    %179 = vmatpush2.msra.mxu0 0.0
    %180 = vmatprep.subr.mxu0 0.0
    %181 = vmatpush2.msra.mxu0 0.0
    %182 = vmatprep.subr.mxu0 0.0
    %183 = vmatpush2.msra.mxu0 0.0
    %184 = vmatprep.subr.mxu0 0.0
    %185 = vmatpush2.msra.mxu0 0.0
    %186 = vmatprep.subr.mxu0 0.0
    %187 = vmatpush2.msra.mxu0 0.0
    %188 = vmatprep.subr.mxu0 0.0
    %189 = vmatpush2.msra.mxu0 0.0
    %190 = vmatprep.subr.mxu0 0.0
    %191 = vmatpush2.msra.mxu0 0.0
    %192 = vmatprep.subr.mxu0 0.0
    %193 = vmatpush2.msra.mxu0 0.0
    %194 = vmatprep.subr.mxu0 0.0
    %195 = vmatpush2.msra.mxu0 0.0
    %196 = vmatprep.subr.mxu0 0.0
    %197 = vmatpush2.msra.mxu0 0.0
    %198 = vmatprep.subr.mxu0 0.0
    %199 = vmatpush2.msra.mxu0 0.0
    %200 = vmatprep.subr.mxu0 0.0
    %201 = vmatpush2.msra.mxu0 0.0
    %202 = vmatprep.subr.mxu0 0.0
    %203 = vmatpush2.msra.mxu0 0.0
    %204 = vmatprep.subr.mxu0 0.0
    %205 = vmatpush2.msra.mxu0 0.0
    %206 = vmatprep.subr.mxu0 0.0
    %207 = vmatpush2.msra.mxu0 0.0
    %208 = vmatprep.mubr.f32.mxu0 0.0
    %209 = vmatmul.mubr.f32.gmra.mxu0 %v142
    %v210 = vpop.f32.mrf.mxu0
    %v211 = vadd.f32 %v138, %v210
    %v212 = vpop.f32.mrf.mxu0
    %213 = vdwg.mxu0
    %v214 = vld [vmem:[%s6] sm:$0xff]
    %v215 = vld [vmem:[%s6 + $0x8] sm:$0xff]
    %v216 = vld [vmem:[%s6 + $0x10] sm:$0xff]
    %v217 = vld [vmem:[%s6 + $0x18] sm:$0xff]
    %v218 = vld [vmem:[%s7] sm:$0x1]
    %v219 = vld [vmem:[%s1] sm:$0x1]
    %v221 = vsel %vm51, %v219, 0
    %223 = vmatprep.subr.mxu0 0.0
    %224 = vmatpush1.msra.mxu0 0.0
    %225 = vmatprep.subr.mxu0 0.0
    %226 = vmatpush1.msra.mxu0 0.0
    %227 = vmatprep.subr.mxu0 0.0
    %228 = vmatpush1.msra.mxu0 0.0
    %229 = vmatprep.subr.mxu0 0.0
    %230 = vmatpush1.msra.mxu0 0.0
    %231 = vmatprep.subr.mxu0 0.0
    %232 = vmatpush1.msra.mxu0 0.0
    %233 = vmatprep.subr.mxu0 0.0
    %234 = vmatpush1.msra.mxu0 0.0
    %235 = vmatprep.subr.mxu0 0.0
    %236 = vmatpush1.msra.mxu0 0.0
    %237 = vmatprep.subr.mxu0 0.0
    %238 = vmatpush1.msra.mxu0 0.0
    %239 = vmatprep.subr.mxu0 0.0
    %240 = vmatpush1.msra.mxu0 0.0
    %241 = vmatprep.subr.mxu0 0.0
    %242 = vmatpush1.msra.mxu0 0.0
    %243 = vmatprep.subr.mxu0 0.0
    %244 = vmatpush1.msra.mxu0 0.0
    %245 = vmatprep.subr.mxu0 0.0
    %246 = vmatpush1.msra.mxu0 0.0
    %247 = vmatprep.subr.mxu0 0.0
    %248 = vmatpush1.msra.mxu0 %v217
    %249 = vmatprep.subr.mxu0 0.0
    %250 = vmatpush1.msra.mxu0 %v216
    %251 = vmatprep.subr.mxu0 0.0
    %252 = vmatpush1.msra.mxu0 %v215
    %253 = vmatprep.subr.mxu0 0.0
    %254 = vmatpush1.msra.mxu0 %v214
    %255 = vmatprep.subr.mxu0 0.0
    %256 = vmatpush2.msra.mxu0 0.0
    %257 = vmatprep.subr.mxu0 0.0
    %258 = vmatpush2.msra.mxu0 0.0
    %259 = vmatprep.subr.mxu0 0.0
    %260 = vmatpush2.msra.mxu0 0.0
    %261 = vmatprep.subr.mxu0 0.0
    %262 = vmatpush2.msra.mxu0 0.0
    %263 = vmatprep.subr.mxu0 0.0
    %264 = vmatpush2.msra.mxu0 0.0
    %265 = vmatprep.subr.mxu0 0.0
    %266 = vmatpush2.msra.mxu0 0.0
    %267 = vmatprep.subr.mxu0 0.0
    %268 = vmatpush2.msra.mxu0 0.0
    %269 = vmatprep.subr.mxu0 0.0
    %270 = vmatpush2.msra.mxu0 0.0
    %271 = vmatprep.subr.mxu0 0.0
    %272 = vmatpush2.msra.mxu0 0.0
    %273 = vmatprep.subr.mxu0 0.0
    %274 = vmatpush2.msra.mxu0 0.0
    %275 = vmatprep.subr.mxu0 0.0
    %276 = vmatpush2.msra.mxu0 0.0
    %277 = vmatprep.subr.mxu0 0.0
    %278 = vmatpush2.msra.mxu0 0.0
    %279 = vmatprep.subr.mxu0 0.0
    %280 = vmatpush2.msra.mxu0 0.0
    %281 = vmatprep.subr.mxu0 0.0
    %282 = vmatpush2.msra.mxu0 0.0
    %283 = vmatprep.subr.mxu0 0.0
    %284 = vmatpush2.msra.mxu0 0.0
    %285 = vmatprep.subr.mxu0 0.0
    %286 = vmatpush2.msra.mxu0 0.0
    %287 = vmatprep.mubr.f32.mxu0 0.0
    %288 = vmatmul.mubr.f32.gmra.mxu0 %v221
    %v289 = vpop.f32.mrf.mxu0
    %v290 = vadd.f32 0.0, %v289
    %v291 = vpop.f32.mrf.mxu0
    %292 = vdwg.mxu0
    %v293 = vadd.f32 %v211, %v290
    %v294 = vxor.u32 %v293, 2147483648
    %v295 = vmul.f32 %v294, 1.442695
    %v296 = vpow.pop %v295
    %v297 = vadd.f32 %v296, 1.0
    %v298 = vrcp.pop %v297
    %v299 = vmul.f32 1.0, %v298
    %v301 = vlaneseq
    %v302 = vshrl.u32 %v301, 7
    %v303 = vsub.s32 0, %v302
    %v304 = vrot.slane %v218, %v303
    %305 = vrot.lane.b32.xlu0 %v304, 64
    %v306 = vpop.permute.xlu0 %305
    %v308 = vadd.f32 %v290, %v306
    %310 = vrot.lane.b32.xlu0 %v308, 64
    %v311 = vpop.permute.xlu0 %310
    %v313 = vmul.f32 %v299, %v311
    %315 = vrot.lane.b32.xlu0 %v313, 64
    %v316 = vpop.permute.xlu0 %315
    %v318 = vadd.f32 %v211, %v316
    %v319 = vtanh.pop %v318
    %v320 = vsub.f32 1.0, %v299
    %322 = vrot.lane.b32.xlu0 %v319, 96
    %v323 = vpop.permute.xlu0 %322
    %v325 = vmul.f32 %v320, %v323
    %v326 = vlaneseq
    %v327 = vshrl.u32 %v326, 7
    %v328 = vsub.s32 0, %v327
    %v329 = vrot.slane %v219, %v328
    %330 = vrot.lane.b32.xlu0 %v329, 32
    %v331 = vpop.permute.xlu0 %330
    %v333 = vmul.f32 %v299, %v331
    %v334 = vadd.f32 %v325, %v333
    %336 = vrot.lane.b32.xlu0 %v334, 96
    %v337 = vpop.permute.xlu0 %336
    %vm339 = vcmask 253952
    %340 = vst.msk [vmem:[#allocation2] sm:$0x1] %vm339, %v337
    %v341 = vsel %vm51, %v337, 0
    %343 = vmatprep.subr.mxu0 0.0
    %344 = vmatpush1.msra.mxu0 0.0
    %345 = vmatprep.subr.mxu0 0.0
    %346 = vmatpush1.msra.mxu0 0.0
    %347 = vmatprep.subr.mxu0 0.0
    %348 = vmatpush1.msra.mxu0 0.0
    %349 = vmatprep.subr.mxu0 0.0
    %350 = vmatpush1.msra.mxu0 0.0
    %351 = vmatprep.subr.mxu0 0.0
    %352 = vmatpush1.msra.mxu0 0.0
    %353 = vmatprep.subr.mxu0 0.0
    %354 = vmatpush1.msra.mxu0 0.0
    %355 = vmatprep.subr.mxu0 0.0
    %356 = vmatpush1.msra.mxu0 0.0
    %357 = vmatprep.subr.mxu0 0.0
    %358 = vmatpush1.msra.mxu0 0.0
    %359 = vmatprep.subr.mxu0 0.0
    %360 = vmatpush1.msra.mxu0 0.0
    %361 = vmatprep.subr.mxu0 0.0
    %362 = vmatpush1.msra.mxu0 0.0
    %363 = vmatprep.subr.mxu0 0.0
    %364 = vmatpush1.msra.mxu0 0.0
    %365 = vmatprep.subr.mxu0 0.0
    %366 = vmatpush1.msra.mxu0 0.0
    %367 = vmatprep.subr.mxu0 0.0
    %368 = vmatpush1.msra.mxu0 %v217
    %369 = vmatprep.subr.mxu0 0.0
    %370 = vmatpush1.msra.mxu0 %v216
    %371 = vmatprep.subr.mxu0 0.0
    %372 = vmatpush1.msra.mxu0 %v215
    %373 = vmatprep.subr.mxu0 0.0
    %374 = vmatpush1.msra.mxu0 %v214
    %375 = vmatprep.subr.mxu0 0.0
    %376 = vmatpush2.msra.mxu0 0.0
    %377 = vmatprep.subr.mxu0 0.0
    %378 = vmatpush2.msra.mxu0 0.0
    %379 = vmatprep.subr.mxu0 0.0
    %380 = vmatpush2.msra.mxu0 0.0
    %381 = vmatprep.subr.mxu0 0.0
    %382 = vmatpush2.msra.mxu0 0.0
    %383 = vmatprep.subr.mxu0 0.0
    %384 = vmatpush2.msra.mxu0 0.0
    %385 = vmatprep.subr.mxu0 0.0
    %386 = vmatpush2.msra.mxu0 0.0
    %387 = vmatprep.subr.mxu0 0.0
    %388 = vmatpush2.msra.mxu0 0.0
    %389 = vmatprep.subr.mxu0 0.0
    %390 = vmatpush2.msra.mxu0 0.0
    %391 = vmatprep.subr.mxu0 0.0
    %392 = vmatpush2.msra.mxu0 0.0
    %393 = vmatprep.subr.mxu0 0.0
    %394 = vmatpush2.msra.mxu0 0.0
    %395 = vmatprep.subr.mxu0 0.0
    %396 = vmatpush2.msra.mxu0 0.0
    %397 = vmatprep.subr.mxu0 0.0
    %398 = vmatpush2.msra.mxu0 0.0
    %399 = vmatprep.subr.mxu0 0.0
    %400 = vmatpush2.msra.mxu0 0.0
    %401 = vmatprep.subr.mxu0 0.0
    %402 = vmatpush2.msra.mxu0 0.0
    %403 = vmatprep.subr.mxu0 0.0
    %404 = vmatpush2.msra.mxu0 0.0
    %405 = vmatprep.subr.mxu0 0.0
    %406 = vmatpush2.msra.mxu0 0.0
    %407 = vmatprep.mubr.f32.mxu0 0.0
    %408 = vmatmul.mubr.f32.gmra.mxu0 %v341
    %v409 = vpop.f32.mrf.mxu0
    %v410 = vadd.f32 0.0, %v409
    %v411 = vpop.f32.mrf.mxu0
    %412 = vdwg.mxu0
    %v414 = vrot.slane %v410, 7
    %v416 = vadd.f32 %v211, %v414
    %v417 = vxor.u32 %v416, 2147483648
    %v418 = vmul.f32 %v417, 1.442695
    %v419 = vpow.pop %v418
    %v420 = vadd.f32 %v419, 1.0
    %v421 = vrcp.pop %v420
    %v422 = vmul.f32 1.0, %v421
    %v423 = vadd.f32 %v410, %v306
    %v425 = vrot.slane %v423, 7
    %426 = vrot.lane.b32.xlu0 %v425, 64
    %v427 = vpop.permute.xlu0 %426
    %v429 = vmul.f32 %v422, %v427
    %431 = vrot.lane.b32.xlu0 %v429, 64
    %v432 = vpop.permute.xlu0 %431
    %v434 = vadd.f32 %v211, %v432
    %v435 = vtanh.pop %v434
    %v436 = vsub.f32 1.0, %v422
    %438 = vrot.lane.b32.xlu0 %v435, 96
    %v439 = vpop.permute.xlu0 %438
    %v441 = vmul.f32 %v436, %v439
    %v442 = vrot.slane %v334, 7
    %v444 = vmul.f32 %v422, %v442
    %v445 = vadd.f32 %v441, %v444
    %447 = vrot.lane.b32.xlu0 %v445, 96
    %v448 = vpop.permute.xlu0 %447
    %vm450 = vcmask 254977
    %451 = vst.msk [vmem:[#allocation2] sm:$0x2] %vm450, %v448
    %v452 = vrot.slane %v445, 1
    %453 = vrot.lane.b32.xlu0 %v452, 96
    %v454 = vpop.permute.xlu0 %453
    %v455 = vsel %vm51, %v454, 0
    %457 = vmatprep.subr.mxu0 0.0
    %458 = vmatpush1.msra.mxu0 0.0
    %459 = vmatprep.subr.mxu0 0.0
    %460 = vmatpush1.msra.mxu0 0.0
    %461 = vmatprep.subr.mxu0 0.0
    %462 = vmatpush1.msra.mxu0 0.0
    %463 = vmatprep.subr.mxu0 0.0
    %464 = vmatpush1.msra.mxu0 0.0
    %465 = vmatprep.subr.mxu0 0.0
    %466 = vmatpush1.msra.mxu0 0.0
    %467 = vmatprep.subr.mxu0 0.0
    %468 = vmatpush1.msra.mxu0 0.0
    %469 = vmatprep.subr.mxu0 0.0
    %470 = vmatpush1.msra.mxu0 0.0
    %471 = vmatprep.subr.mxu0 0.0
    %472 = vmatpush1.msra.mxu0 0.0
    %473 = vmatprep.subr.mxu0 0.0
    %474 = vmatpush1.msra.mxu0 0.0
    %475 = vmatprep.subr.mxu0 0.0
    %476 = vmatpush1.msra.mxu0 0.0
    %477 = vmatprep.subr.mxu0 0.0
    %478 = vmatpush1.msra.mxu0 0.0
    %479 = vmatprep.subr.mxu0 0.0
    %480 = vmatpush1.msra.mxu0 0.0
    %481 = vmatprep.subr.mxu0 0.0
    %482 = vmatpush1.msra.mxu0 %v217
    %483 = vmatprep.subr.mxu0 0.0
    %484 = vmatpush1.msra.mxu0 %v216
    %485 = vmatprep.subr.mxu0 0.0
    %486 = vmatpush1.msra.mxu0 %v215
    %487 = vmatprep.subr.mxu0 0.0
    %488 = vmatpush1.msra.mxu0 %v214
    %489 = vmatprep.subr.mxu0 0.0
    %490 = vmatpush2.msra.mxu0 0.0
    %491 = vmatprep.subr.mxu0 0.0
    %492 = vmatpush2.msra.mxu0 0.0
    %493 = vmatprep.subr.mxu0 0.0
    %494 = vmatpush2.msra.mxu0 0.0
    %495 = vmatprep.subr.mxu0 0.0
    %496 = vmatpush2.msra.mxu0 0.0
    %497 = vmatprep.subr.mxu0 0.0
    %498 = vmatpush2.msra.mxu0 0.0
    %499 = vmatprep.subr.mxu0 0.0
    %500 = vmatpush2.msra.mxu0 0.0
    %501 = vmatprep.subr.mxu0 0.0
    %502 = vmatpush2.msra.mxu0 0.0
    %503 = vmatprep.subr.mxu0 0.0
    %504 = vmatpush2.msra.mxu0 0.0
    %505 = vmatprep.subr.mxu0 0.0
    %506 = vmatpush2.msra.mxu0 0.0
    %507 = vmatprep.subr.mxu0 0.0
    %508 = vmatpush2.msra.mxu0 0.0
    %509 = vmatprep.subr.mxu0 0.0
    %510 = vmatpush2.msra.mxu0 0.0
    %511 = vmatprep.subr.mxu0 0.0
    %512 = vmatpush2.msra.mxu0 0.0
    %513 = vmatprep.subr.mxu0 0.0
    %514 = vmatpush2.msra.mxu0 0.0
    %515 = vmatprep.subr.mxu0 0.0
    %516 = vmatpush2.msra.mxu0 0.0
    %517 = vmatprep.subr.mxu0 0.0
    %518 = vmatpush2.msra.mxu0 0.0
    %519 = vmatprep.subr.mxu0 0.0
    %520 = vmatpush2.msra.mxu0 0.0
    %521 = vmatprep.mubr.f32.mxu0 0.0
    %522 = vmatmul.mubr.f32.gmra.mxu0 %v455
    %v523 = vpop.f32.mrf.mxu0
    %v524 = vadd.f32 0.0, %v523
    %v525 = vpop.f32.mrf.mxu0
    %526 = vdwg.mxu0
    %v528 = vrot.slane %v524, 6
    %v530 = vadd.f32 %v211, %v528
    %v531 = vxor.u32 %v530, 2147483648
    %v532 = vmul.f32 %v531, 1.442695
    %v533 = vpow.pop %v532
    %v534 = vadd.f32 %v533, 1.0
    %v535 = vrcp.pop %v534
    %v536 = vmul.f32 1.0, %v535
    %v537 = vadd.f32 %v524, %v306
    %v539 = vrot.slane %v537, 6
    %540 = vrot.lane.b32.xlu0 %v539, 64
    %v541 = vpop.permute.xlu0 %540
    %v543 = vmul.f32 %v536, %v541
    %545 = vrot.lane.b32.xlu0 %v543, 64
    %v546 = vpop.permute.xlu0 %545
    %v548 = vadd.f32 %v211, %v546
    %v549 = vtanh.pop %v548
    %v550 = vsub.f32 1.0, %v536
    %552 = vrot.lane.b32.xlu0 %v549, 96
    %v553 = vpop.permute.xlu0 %552
    %v555 = vmul.f32 %v550, %v553
    %v556 = vrot.slane %v445, 7
    %v558 = vmul.f32 %v536, %v556
    %v559 = vadd.f32 %v555, %v558
    %561 = vrot.lane.b32.xlu0 %v559, 96
    %v562 = vpop.permute.xlu0 %561
    %vm564 = vcmask 256002
    %565 = vst.msk [vmem:[#allocation2] sm:$0x4] %vm564, %v562
    %v566 = vrot.slane %v559, 2
    %567 = vrot.lane.b32.xlu0 %v566, 96
    %v568 = vpop.permute.xlu0 %567
    %v569 = vsel %vm51, %v568, 0
    %571 = vmatprep.subr.mxu0 0.0
    %572 = vmatpush1.msra.mxu0 0.0
    %573 = vmatprep.subr.mxu0 0.0
    %574 = vmatpush1.msra.mxu0 0.0
    %575 = vmatprep.subr.mxu0 0.0
    %576 = vmatpush1.msra.mxu0 0.0
    %577 = vmatprep.subr.mxu0 0.0
    %578 = vmatpush1.msra.mxu0 0.0
    %579 = vmatprep.subr.mxu0 0.0
    %580 = vmatpush1.msra.mxu0 0.0
    %581 = vmatprep.subr.mxu0 0.0
    %582 = vmatpush1.msra.mxu0 0.0
    %583 = vmatprep.subr.mxu0 0.0
    %584 = vmatpush1.msra.mxu0 0.0
    %585 = vmatprep.subr.mxu0 0.0
    %586 = vmatpush1.msra.mxu0 0.0
    %587 = vmatprep.subr.mxu0 0.0
    %588 = vmatpush1.msra.mxu0 0.0
    %589 = vmatprep.subr.mxu0 0.0
    %590 = vmatpush1.msra.mxu0 0.0
    %591 = vmatprep.subr.mxu0 0.0
    %592 = vmatpush1.msra.mxu0 0.0
    %593 = vmatprep.subr.mxu0 0.0
    %594 = vmatpush1.msra.mxu0 0.0
    %595 = vmatprep.subr.mxu0 0.0
    %596 = vmatpush1.msra.mxu0 %v217
    %597 = vmatprep.subr.mxu0 0.0
    %598 = vmatpush1.msra.mxu0 %v216
    %599 = vmatprep.subr.mxu0 0.0
    %600 = vmatpush1.msra.mxu0 %v215
    %601 = vmatprep.subr.mxu0 0.0
    %602 = vmatpush1.msra.mxu0 %v214
    %603 = vmatprep.subr.mxu0 0.0
    %604 = vmatpush2.msra.mxu0 0.0
    %605 = vmatprep.subr.mxu0 0.0
    %606 = vmatpush2.msra.mxu0 0.0
    %607 = vmatprep.subr.mxu0 0.0
    %608 = vmatpush2.msra.mxu0 0.0
    %609 = vmatprep.subr.mxu0 0.0
    %610 = vmatpush2.msra.mxu0 0.0
    %611 = vmatprep.subr.mxu0 0.0
    %612 = vmatpush2.msra.mxu0 0.0
    %613 = vmatprep.subr.mxu0 0.0
    %614 = vmatpush2.msra.mxu0 0.0
    %615 = vmatprep.subr.mxu0 0.0
    %616 = vmatpush2.msra.mxu0 0.0
    %617 = vmatprep.subr.mxu0 0.0
    %618 = vmatpush2.msra.mxu0 0.0
    %619 = vmatprep.subr.mxu0 0.0
    %620 = vmatpush2.msra.mxu0 0.0
    %621 = vmatprep.subr.mxu0 0.0
    %622 = vmatpush2.msra.mxu0 0.0
    %623 = vmatprep.subr.mxu0 0.0
    %624 = vmatpush2.msra.mxu0 0.0
    %625 = vmatprep.subr.mxu0 0.0
    %626 = vmatpush2.msra.mxu0 0.0
    %627 = vmatprep.subr.mxu0 0.0
    %628 = vmatpush2.msra.mxu0 0.0
    %629 = vmatprep.subr.mxu0 0.0
    %630 = vmatpush2.msra.mxu0 0.0
    %631 = vmatprep.subr.mxu0 0.0
    %632 = vmatpush2.msra.mxu0 0.0
    %633 = vmatprep.subr.mxu0 0.0
    %634 = vmatpush2.msra.mxu0 0.0
    %635 = vmatprep.mubr.f32.mxu0 0.0
    %636 = vmatmul.mubr.f32.gmra.mxu0 %v569
    %v637 = vpop.f32.mrf.mxu0
    %v638 = vadd.f32 0.0, %v637
    %v639 = vpop.f32.mrf.mxu0
    %640 = vdwg.mxu0
    %v642 = vrot.slane %v638, 5
    %v644 = vadd.f32 %v211, %v642
    %v645 = vxor.u32 %v644, 2147483648
    %v646 = vmul.f32 %v645, 1.442695
    %v647 = vpow.pop %v646
    %v648 = vadd.f32 %v647, 1.0
    %v649 = vrcp.pop %v648
    %v650 = vmul.f32 1.0, %v649
    %v651 = vadd.f32 %v638, %v306
    %v653 = vrot.slane %v651, 5
    %654 = vrot.lane.b32.xlu0 %v653, 64
    %v655 = vpop.permute.xlu0 %654
    %v657 = vmul.f32 %v650, %v655
    %659 = vrot.lane.b32.xlu0 %v657, 64
    %v660 = vpop.permute.xlu0 %659
    %v662 = vadd.f32 %v211, %v660
    %v663 = vtanh.pop %v662
    %v664 = vsub.f32 1.0, %v650
    %666 = vrot.lane.b32.xlu0 %v663, 96
    %v667 = vpop.permute.xlu0 %666
    %v669 = vmul.f32 %v664, %v667
    %v670 = vrot.slane %v559, 7
    %v672 = vmul.f32 %v650, %v670
    %v673 = vadd.f32 %v669, %v672
    %675 = vrot.lane.b32.xlu0 %v673, 96
    %v676 = vpop.permute.xlu0 %675
    %vm678 = vcmask 257027
    %679 = vst.msk [vmem:[#allocation2] sm:$0x8] %vm678, %v676
    %v680 = vrot.slane %v673, 3
    %681 = vrot.lane.b32.xlu0 %v680, 96
    %v682 = vpop.permute.xlu0 %681
    %v683 = vsel %vm51, %v682, 0
    %685 = vmatprep.subr.mxu0 0.0
    %686 = vmatpush1.msra.mxu0 0.0
    %687 = vmatprep.subr.mxu0 0.0
    %688 = vmatpush1.msra.mxu0 0.0
    %689 = vmatprep.subr.mxu0 0.0
    %690 = vmatpush1.msra.mxu0 0.0
    %691 = vmatprep.subr.mxu0 0.0
    %692 = vmatpush1.msra.mxu0 0.0
    %693 = vmatprep.subr.mxu0 0.0
    %694 = vmatpush1.msra.mxu0 0.0
    %695 = vmatprep.subr.mxu0 0.0
    %696 = vmatpush1.msra.mxu0 0.0
    %697 = vmatprep.subr.mxu0 0.0
    %698 = vmatpush1.msra.mxu0 0.0
    %699 = vmatprep.subr.mxu0 0.0
    %700 = vmatpush1.msra.mxu0 0.0
    %701 = vmatprep.subr.mxu0 0.0
    %702 = vmatpush1.msra.mxu0 0.0
    %703 = vmatprep.subr.mxu0 0.0
    %704 = vmatpush1.msra.mxu0 0.0
    %705 = vmatprep.subr.mxu0 0.0
    %706 = vmatpush1.msra.mxu0 0.0
    %707 = vmatprep.subr.mxu0 0.0
    %708 = vmatpush1.msra.mxu0 0.0
    %709 = vmatprep.subr.mxu0 0.0
    %710 = vmatpush1.msra.mxu0 %v217
    %711 = vmatprep.subr.mxu0 0.0
    %712 = vmatpush1.msra.mxu0 %v216
    %713 = vmatprep.subr.mxu0 0.0
    %714 = vmatpush1.msra.mxu0 %v215
    %715 = vmatprep.subr.mxu0 0.0
    %716 = vmatpush1.msra.mxu0 %v214
    %717 = vmatprep.subr.mxu0 0.0
    %718 = vmatpush2.msra.mxu0 0.0
    %719 = vmatprep.subr.mxu0 0.0
    %720 = vmatpush2.msra.mxu0 0.0
    %721 = vmatprep.subr.mxu0 0.0
    %722 = vmatpush2.msra.mxu0 0.0
    %723 = vmatprep.subr.mxu0 0.0
    %724 = vmatpush2.msra.mxu0 0.0
    %725 = vmatprep.subr.mxu0 0.0
    %726 = vmatpush2.msra.mxu0 0.0
    %727 = vmatprep.subr.mxu0 0.0
    %728 = vmatpush2.msra.mxu0 0.0
    %729 = vmatprep.subr.mxu0 0.0
    %730 = vmatpush2.msra.mxu0 0.0
    %731 = vmatprep.subr.mxu0 0.0
    %732 = vmatpush2.msra.mxu0 0.0
    %733 = vmatprep.subr.mxu0 0.0
    %734 = vmatpush2.msra.mxu0 0.0
    %735 = vmatprep.subr.mxu0 0.0
    %736 = vmatpush2.msra.mxu0 0.0
    %737 = vmatprep.subr.mxu0 0.0
    %738 = vmatpush2.msra.mxu0 0.0
    %739 = vmatprep.subr.mxu0 0.0
    %740 = vmatpush2.msra.mxu0 0.0
    %741 = vmatprep.subr.mxu0 0.0
    %742 = vmatpush2.msra.mxu0 0.0
    %743 = vmatprep.subr.mxu0 0.0
    %744 = vmatpush2.msra.mxu0 0.0
    %745 = vmatprep.subr.mxu0 0.0
    %746 = vmatpush2.msra.mxu0 0.0
    %747 = vmatprep.subr.mxu0 0.0
    %748 = vmatpush2.msra.mxu0 0.0
    %749 = vmatprep.mubr.f32.mxu0 0.0
    %750 = vmatmul.mubr.f32.gmra.mxu0 %v683
    %v751 = vpop.f32.mrf.mxu0
    %v752 = vadd.f32 0.0, %v751
    %v753 = vpop.f32.mrf.mxu0
    %754 = vdwg.mxu0
    %v756 = vrot.slane %v752, 4
    %v758 = vadd.f32 %v211, %v756
    %v759 = vxor.u32 %v758, 2147483648
    %v760 = vmul.f32 %v759, 1.442695
    %v761 = vpow.pop %v760
    %v762 = vadd.f32 %v761, 1.0
    %v763 = vrcp.pop %v762
    %v764 = vmul.f32 1.0, %v763
    %v765 = vadd.f32 %v752, %v306
    %v767 = vrot.slane %v765, 4
    %768 = vrot.lane.b32.xlu0 %v767, 64
    %v769 = vpop.permute.xlu0 %768
    %v771 = vmul.f32 %v764, %v769
    %773 = vrot.lane.b32.xlu0 %v771, 64
    %v774 = vpop.permute.xlu0 %773
    %v776 = vadd.f32 %v211, %v774
    %v777 = vtanh.pop %v776
    %v778 = vsub.f32 1.0, %v764
    %780 = vrot.lane.b32.xlu0 %v777, 96
    %v781 = vpop.permute.xlu0 %780
    %v783 = vmul.f32 %v778, %v781
    %v784 = vrot.slane %v673, 7
    %v786 = vmul.f32 %v764, %v784
    %v787 = vadd.f32 %v783, %v786
    %789 = vrot.lane.b32.xlu0 %v787, 96
    %v790 = vpop.permute.xlu0 %789
    %vm792 = vcmask 258052
    %793 = vst.msk [vmem:[#allocation2] sm:$0x10] %vm792, %v790
    %v794 = vrot.slane %v787, 4
    %795 = vrot.lane.b32.xlu0 %v794, 96
    %v796 = vpop.permute.xlu0 %795
    %v797 = vsel %vm51, %v796, 0
    %799 = vmatprep.subr.mxu0 0.0
    %800 = vmatpush1.msra.mxu0 0.0
    %801 = vmatprep.subr.mxu0 0.0
    %802 = vmatpush1.msra.mxu0 0.0
    %803 = vmatprep.subr.mxu0 0.0
    %804 = vmatpush1.msra.mxu0 0.0
    %805 = vmatprep.subr.mxu0 0.0
    %806 = vmatpush1.msra.mxu0 0.0
    %807 = vmatprep.subr.mxu0 0.0
    %808 = vmatpush1.msra.mxu0 0.0
    %809 = vmatprep.subr.mxu0 0.0
    %810 = vmatpush1.msra.mxu0 0.0
    %811 = vmatprep.subr.mxu0 0.0
    %812 = vmatpush1.msra.mxu0 0.0
    %813 = vmatprep.subr.mxu0 0.0
    %814 = vmatpush1.msra.mxu0 0.0
    %815 = vmatprep.subr.mxu0 0.0
    %816 = vmatpush1.msra.mxu0 0.0
    %817 = vmatprep.subr.mxu0 0.0
    %818 = vmatpush1.msra.mxu0 0.0
    %819 = vmatprep.subr.mxu0 0.0
    %820 = vmatpush1.msra.mxu0 0.0
    %821 = vmatprep.subr.mxu0 0.0
    %822 = vmatpush1.msra.mxu0 0.0
    %823 = vmatprep.subr.mxu0 0.0
    %824 = vmatpush1.msra.mxu0 %v217
    %825 = vmatprep.subr.mxu0 0.0
    %826 = vmatpush1.msra.mxu0 %v216
    %827 = vmatprep.subr.mxu0 0.0
    %828 = vmatpush1.msra.mxu0 %v215
    %829 = vmatprep.subr.mxu0 0.0
    %830 = vmatpush1.msra.mxu0 %v214
    %831 = vmatprep.subr.mxu0 0.0
    %832 = vmatpush2.msra.mxu0 0.0
    %833 = vmatprep.subr.mxu0 0.0
    %834 = vmatpush2.msra.mxu0 0.0
    %835 = vmatprep.subr.mxu0 0.0
    %836 = vmatpush2.msra.mxu0 0.0
    %837 = vmatprep.subr.mxu0 0.0
    %838 = vmatpush2.msra.mxu0 0.0
    %839 = vmatprep.subr.mxu0 0.0
    %840 = vmatpush2.msra.mxu0 0.0
    %841 = vmatprep.subr.mxu0 0.0
    %842 = vmatpush2.msra.mxu0 0.0
    %843 = vmatprep.subr.mxu0 0.0
    %844 = vmatpush2.msra.mxu0 0.0
    %845 = vmatprep.subr.mxu0 0.0
    %846 = vmatpush2.msra.mxu0 0.0
    %847 = vmatprep.subr.mxu0 0.0
    %848 = vmatpush2.msra.mxu0 0.0
    %849 = vmatprep.subr.mxu0 0.0
    %850 = vmatpush2.msra.mxu0 0.0
    %851 = vmatprep.subr.mxu0 0.0
    %852 = vmatpush2.msra.mxu0 0.0
    %853 = vmatprep.subr.mxu0 0.0
    %854 = vmatpush2.msra.mxu0 0.0
    %855 = vmatprep.subr.mxu0 0.0
    %856 = vmatpush2.msra.mxu0 0.0
    %857 = vmatprep.subr.mxu0 0.0
    %858 = vmatpush2.msra.mxu0 0.0
    %859 = vmatprep.subr.mxu0 0.0
    %860 = vmatpush2.msra.mxu0 0.0
    %861 = vmatprep.subr.mxu0 0.0
    %862 = vmatpush2.msra.mxu0 0.0
    %863 = vmatprep.mubr.f32.mxu0 0.0
    %864 = vmatmul.mubr.f32.gmra.mxu0 %v797
    %v865 = vpop.f32.mrf.mxu0
    %v866 = vadd.f32 0.0, %v865
    %v867 = vpop.f32.mrf.mxu0
    %868 = vdwg.mxu0
    %v870 = vrot.slane %v866, 3
    %v872 = vadd.f32 %v211, %v870
    %v873 = vxor.u32 %v872, 2147483648
    %v874 = vmul.f32 %v873, 1.442695
    %v875 = vpow.pop %v874
    %v876 = vadd.f32 %v875, 1.0
    %v877 = vrcp.pop %v876
    %v878 = vmul.f32 1.0, %v877
    %v879 = vadd.f32 %v866, %v306
    %v881 = vrot.slane %v879, 3
    %882 = vrot.lane.b32.xlu0 %v881, 64
    %v883 = vpop.permute.xlu0 %882
    %v885 = vmul.f32 %v878, %v883
    %887 = vrot.lane.b32.xlu0 %v885, 64
    %v888 = vpop.permute.xlu0 %887
    %v890 = vadd.f32 %v211, %v888
    %v891 = vtanh.pop %v890
    %v892 = vsub.f32 1.0, %v878
    %894 = vrot.lane.b32.xlu0 %v891, 96
    %v895 = vpop.permute.xlu0 %894
    %v897 = vmul.f32 %v892, %v895
    %v898 = vrot.slane %v787, 7
    %v900 = vmul.f32 %v878, %v898
    %v901 = vadd.f32 %v897, %v900
    %903 = vrot.lane.b32.xlu0 %v901, 96
    %v904 = vpop.permute.xlu0 %903
    %vm906 = vcmask 259077
    %907 = vst.msk [vmem:[#allocation2] sm:$0x20] %vm906, %v904
    %v908 = vrot.slane %v901, 5
    %909 = vrot.lane.b32.xlu0 %v908, 96
    %v910 = vpop.permute.xlu0 %909
    %v911 = vsel %vm51, %v910, 0
    %913 = vmatprep.subr.mxu0 0.0
    %914 = vmatpush1.msra.mxu0 0.0
    %915 = vmatprep.subr.mxu0 0.0
    %916 = vmatpush1.msra.mxu0 0.0
    %917 = vmatprep.subr.mxu0 0.0
    %918 = vmatpush1.msra.mxu0 0.0
    %919 = vmatprep.subr.mxu0 0.0
    %920 = vmatpush1.msra.mxu0 0.0
    %921 = vmatprep.subr.mxu0 0.0
    %922 = vmatpush1.msra.mxu0 0.0
    %923 = vmatprep.subr.mxu0 0.0
    %924 = vmatpush1.msra.mxu0 0.0
    %925 = vmatprep.subr.mxu0 0.0
    %926 = vmatpush1.msra.mxu0 0.0
    %927 = vmatprep.subr.mxu0 0.0
    %928 = vmatpush1.msra.mxu0 0.0
    %929 = vmatprep.subr.mxu0 0.0
    %930 = vmatpush1.msra.mxu0 0.0
    %931 = vmatprep.subr.mxu0 0.0
    %932 = vmatpush1.msra.mxu0 0.0
    %933 = vmatprep.subr.mxu0 0.0
    %934 = vmatpush1.msra.mxu0 0.0
    %935 = vmatprep.subr.mxu0 0.0
    %936 = vmatpush1.msra.mxu0 0.0
    %937 = vmatprep.subr.mxu0 0.0
    %938 = vmatpush1.msra.mxu0 %v217
    %939 = vmatprep.subr.mxu0 0.0
    %940 = vmatpush1.msra.mxu0 %v216
    %941 = vmatprep.subr.mxu0 0.0
    %942 = vmatpush1.msra.mxu0 %v215
    %943 = vmatprep.subr.mxu0 0.0
    %944 = vmatpush1.msra.mxu0 %v214
    %945 = vmatprep.subr.mxu0 0.0
    %946 = vmatpush2.msra.mxu0 0.0
    %947 = vmatprep.subr.mxu0 0.0
    %948 = vmatpush2.msra.mxu0 0.0
    %949 = vmatprep.subr.mxu0 0.0
    %950 = vmatpush2.msra.mxu0 0.0
    %951 = vmatprep.subr.mxu0 0.0
    %952 = vmatpush2.msra.mxu0 0.0
    %953 = vmatprep.subr.mxu0 0.0
    %954 = vmatpush2.msra.mxu0 0.0
    %955 = vmatprep.subr.mxu0 0.0
    %956 = vmatpush2.msra.mxu0 0.0
    %957 = vmatprep.subr.mxu0 0.0
    %958 = vmatpush2.msra.mxu0 0.0
    %959 = vmatprep.subr.mxu0 0.0
    %960 = vmatpush2.msra.mxu0 0.0
    %961 = vmatprep.subr.mxu0 0.0
    %962 = vmatpush2.msra.mxu0 0.0
    %963 = vmatprep.subr.mxu0 0.0
    %964 = vmatpush2.msra.mxu0 0.0
    %965 = vmatprep.subr.mxu0 0.0
    %966 = vmatpush2.msra.mxu0 0.0
    %967 = vmatprep.subr.mxu0 0.0
    %968 = vmatpush2.msra.mxu0 0.0
    %969 = vmatprep.subr.mxu0 0.0
    %970 = vmatpush2.msra.mxu0 0.0
    %971 = vmatprep.subr.mxu0 0.0
    %972 = vmatpush2.msra.mxu0 0.0
    %973 = vmatprep.subr.mxu0 0.0
    %974 = vmatpush2.msra.mxu0 0.0
    %975 = vmatprep.subr.mxu0 0.0
    %976 = vmatpush2.msra.mxu0 0.0
    %977 = vmatprep.mubr.f32.mxu0 0.0
    %978 = vmatmul.mubr.f32.gmra.mxu0 %v911
    %v979 = vpop.f32.mrf.mxu0
    %v980 = vadd.f32 0.0, %v979
    %v981 = vpop.f32.mrf.mxu0
    %982 = vdwg.mxu0
    %v984 = vrot.slane %v980, 2
    %v986 = vadd.f32 %v211, %v984
    %v987 = vxor.u32 %v986, 2147483648
    %v988 = vmul.f32 %v987, 1.442695
    %v989 = vpow.pop %v988
    %v990 = vadd.f32 %v989, 1.0
    %v991 = vrcp.pop %v990
    %v992 = vmul.f32 1.0, %v991
    %v993 = vadd.f32 %v980, %v306
    %v995 = vrot.slane %v993, 2
    %996 = vrot.lane.b32.xlu0 %v995, 64
    %v997 = vpop.permute.xlu0 %996
    %v999 = vmul.f32 %v992, %v997
    %1001 = vrot.lane.b32.xlu0 %v999, 64
    %v1002 = vpop.permute.xlu0 %1001
    %v1004 = vadd.f32 %v211, %v1002
    %v1005 = vtanh.pop %v1004
    %v1006 = vsub.f32 1.0, %v992
    %1008 = vrot.lane.b32.xlu0 %v1005, 96
    %v1009 = vpop.permute.xlu0 %1008
    %v1011 = vmul.f32 %v1006, %v1009
    %v1012 = vrot.slane %v901, 7
    %v1014 = vmul.f32 %v992, %v1012
    %v1015 = vadd.f32 %v1011, %v1014
    %1017 = vrot.lane.b32.xlu0 %v1015, 96
    %v1018 = vpop.permute.xlu0 %1017
    %vm1020 = vcmask 260102
    %1021 = vst.msk [vmem:[#allocation2] sm:$0x40] %vm1020, %v1018
    %v1022 = vrot.slane %v1015, 6
    %1023 = vrot.lane.b32.xlu0 %v1022, 96
    %v1024 = vpop.permute.xlu0 %1023
    %v1025 = vsel %vm51, %v1024, 0
    %1027 = vmatprep.subr.mxu0 0.0
    %1028 = vmatpush1.msra.mxu0 0.0
    %1029 = vmatprep.subr.mxu0 0.0
    %1030 = vmatpush1.msra.mxu0 0.0
    %1031 = vmatprep.subr.mxu0 0.0
    %1032 = vmatpush1.msra.mxu0 0.0
    %1033 = vmatprep.subr.mxu0 0.0
    %1034 = vmatpush1.msra.mxu0 0.0
    %1035 = vmatprep.subr.mxu0 0.0
    %1036 = vmatpush1.msra.mxu0 0.0
    %1037 = vmatprep.subr.mxu0 0.0
    %1038 = vmatpush1.msra.mxu0 0.0
    %1039 = vmatprep.subr.mxu0 0.0
    %1040 = vmatpush1.msra.mxu0 0.0
    %1041 = vmatprep.subr.mxu0 0.0
    %1042 = vmatpush1.msra.mxu0 0.0
    %1043 = vmatprep.subr.mxu0 0.0
    %1044 = vmatpush1.msra.mxu0 0.0
    %1045 = vmatprep.subr.mxu0 0.0
    %1046 = vmatpush1.msra.mxu0 0.0
    %1047 = vmatprep.subr.mxu0 0.0
    %1048 = vmatpush1.msra.mxu0 0.0
    %1049 = vmatprep.subr.mxu0 0.0
    %1050 = vmatpush1.msra.mxu0 0.0
    %1051 = vmatprep.subr.mxu0 0.0
    %1052 = vmatpush1.msra.mxu0 %v217
    %1053 = vmatprep.subr.mxu0 0.0
    %1054 = vmatpush1.msra.mxu0 %v216
    %1055 = vmatprep.subr.mxu0 0.0
    %1056 = vmatpush1.msra.mxu0 %v215
    %1057 = vmatprep.subr.mxu0 0.0
    %1058 = vmatpush1.msra.mxu0 %v214
    %1059 = vmatprep.subr.mxu0 0.0
    %1060 = vmatpush2.msra.mxu0 0.0
    %1061 = vmatprep.subr.mxu0 0.0
    %1062 = vmatpush2.msra.mxu0 0.0
    %1063 = vmatprep.subr.mxu0 0.0
    %1064 = vmatpush2.msra.mxu0 0.0
    %1065 = vmatprep.subr.mxu0 0.0
    %1066 = vmatpush2.msra.mxu0 0.0
    %1067 = vmatprep.subr.mxu0 0.0
    %1068 = vmatpush2.msra.mxu0 0.0
    %1069 = vmatprep.subr.mxu0 0.0
    %1070 = vmatpush2.msra.mxu0 0.0
    %1071 = vmatprep.subr.mxu0 0.0
    %1072 = vmatpush2.msra.mxu0 0.0
    %1073 = vmatprep.subr.mxu0 0.0
    %1074 = vmatpush2.msra.mxu0 0.0
    %1075 = vmatprep.subr.mxu0 0.0
    %1076 = vmatpush2.msra.mxu0 0.0
    %1077 = vmatprep.subr.mxu0 0.0
    %1078 = vmatpush2.msra.mxu0 0.0
    %1079 = vmatprep.subr.mxu0 0.0
    %1080 = vmatpush2.msra.mxu0 0.0
    %1081 = vmatprep.subr.mxu0 0.0
    %1082 = vmatpush2.msra.mxu0 0.0
    %1083 = vmatprep.subr.mxu0 0.0
    %1084 = vmatpush2.msra.mxu0 0.0
    %1085 = vmatprep.subr.mxu0 0.0
    %1086 = vmatpush2.msra.mxu0 0.0
    %1087 = vmatprep.subr.mxu0 0.0
    %1088 = vmatpush2.msra.mxu0 0.0
    %1089 = vmatprep.subr.mxu0 0.0
    %1090 = vmatpush2.msra.mxu0 0.0
    %1091 = vmatprep.mubr.f32.mxu0 0.0
    %1092 = vmatmul.mubr.f32.gmra.mxu0 %v1025
    %v1093 = vpop.f32.mrf.mxu0
    %v1094 = vadd.f32 0.0, %v1093
    %v1095 = vpop.f32.mrf.mxu0
    %1096 = vdwg.mxu0
    %v1098 = vrot.slane %v1094, 1
    %v1100 = vadd.f32 %v211, %v1098
    %v1101 = vxor.u32 %v1100, 2147483648
    %v1102 = vmul.f32 %v1101, 1.442695
    %v1103 = vpow.pop %v1102
    %v1104 = vadd.f32 %v1103, 1.0
    %v1105 = vrcp.pop %v1104
    %v1106 = vmul.f32 1.0, %v1105
    %v1107 = vadd.f32 %v1094, %v306
    %v1109 = vrot.slane %v1107, 1
    %1110 = vrot.lane.b32.xlu0 %v1109, 64
    %v1111 = vpop.permute.xlu0 %1110
    %v1113 = vmul.f32 %v1106, %v1111
    %1115 = vrot.lane.b32.xlu0 %v1113, 64
    %v1116 = vpop.permute.xlu0 %1115
    %v1118 = vadd.f32 %v211, %v1116
    %v1119 = vtanh.pop %v1118
    %v1120 = vsub.f32 1.0, %v1106
    %1122 = vrot.lane.b32.xlu0 %v1119, 96
    %v1123 = vpop.permute.xlu0 %1122
    %v1125 = vmul.f32 %v1120, %v1123
    %v1126 = vrot.slane %v1015, 7
    %v1128 = vmul.f32 %v1106, %v1126
    %v1129 = vadd.f32 %v1125, %v1128
    %1131 = vrot.lane.b32.xlu0 %v1129, 96
    %v1132 = vpop.permute.xlu0 %1131
    %vm1134 = vcmask 261127
    %1135 = vst.msk [vmem:[#allocation2] sm:$0x80] %vm1134, %v1132
    %v1136 = vld [vmem:[#allocation2] sm:$0xff]
    %v1137 = vld [vmem:[%s8] sm:$0xff]
    %v1138 = vld [vmem:[%s8 + $0x8] sm:$0xff]
    %v1139 = vld [vmem:[%s8 + $0x10] sm:$0xff]
    %v1140 = vld [vmem:[%s8 + $0x18] sm:$0xff]
    %v1141 = vld [vmem:[%s9] sm:$0x1]
    %v1143 = vlaneseq
    %v1144 = vshrl.u32 %v1143, 7
    %v1145 = vsub.s32 0, %v1144
    %v1146 = vrot.slane %v1141, %v1145
    %v1149 = vsel %vm51, %v1136, 0
    %1151 = vmatprep.subr.mxu0 0.0
    %1152 = vmatpush1.msra.mxu0 0.0
    %1153 = vmatprep.subr.mxu0 0.0
    %1154 = vmatpush1.msra.mxu0 0.0
    %1155 = vmatprep.subr.mxu0 0.0
    %1156 = vmatpush1.msra.mxu0 0.0
    %1157 = vmatprep.subr.mxu0 0.0
    %1158 = vmatpush1.msra.mxu0 0.0
    %1159 = vmatprep.subr.mxu0 0.0
    %1160 = vmatpush1.msra.mxu0 0.0
    %1161 = vmatprep.subr.mxu0 0.0
    %1162 = vmatpush1.msra.mxu0 0.0
    %1163 = vmatprep.subr.mxu0 0.0
    %1164 = vmatpush1.msra.mxu0 0.0
    %1165 = vmatprep.subr.mxu0 0.0
    %1166 = vmatpush1.msra.mxu0 0.0
    %1167 = vmatprep.subr.mxu0 0.0
    %1168 = vmatpush1.msra.mxu0 0.0
    %1169 = vmatprep.subr.mxu0 0.0
    %1170 = vmatpush1.msra.mxu0 0.0
    %1171 = vmatprep.subr.mxu0 0.0
    %1172 = vmatpush1.msra.mxu0 0.0
    %1173 = vmatprep.subr.mxu0 0.0
    %1174 = vmatpush1.msra.mxu0 0.0
    %1175 = vmatprep.subr.mxu0 0.0
    %1176 = vmatpush1.msra.mxu0 %v1140
    %1177 = vmatprep.subr.mxu0 0.0
    %1178 = vmatpush1.msra.mxu0 %v1139
    %1179 = vmatprep.subr.mxu0 0.0
    %1180 = vmatpush1.msra.mxu0 %v1138
    %1181 = vmatprep.subr.mxu0 0.0
    %1182 = vmatpush1.msra.mxu0 %v1137
    %1183 = vmatprep.subr.mxu0 0.0
    %1184 = vmatpush2.msra.mxu0 0.0
    %1185 = vmatprep.subr.mxu0 0.0
    %1186 = vmatpush2.msra.mxu0 0.0
    %1187 = vmatprep.subr.mxu0 0.0
    %1188 = vmatpush2.msra.mxu0 0.0
    %1189 = vmatprep.subr.mxu0 0.0
    %1190 = vmatpush2.msra.mxu0 0.0
    %1191 = vmatprep.subr.mxu0 0.0
    %1192 = vmatpush2.msra.mxu0 0.0
    %1193 = vmatprep.subr.mxu0 0.0
    %1194 = vmatpush2.msra.mxu0 0.0
    %1195 = vmatprep.subr.mxu0 0.0
    %1196 = vmatpush2.msra.mxu0 0.0
    %1197 = vmatprep.subr.mxu0 0.0
    %1198 = vmatpush2.msra.mxu0 0.0
    %1199 = vmatprep.subr.mxu0 0.0
    %1200 = vmatpush2.msra.mxu0 0.0
    %1201 = vmatprep.subr.mxu0 0.0
    %1202 = vmatpush2.msra.mxu0 0.0
    %1203 = vmatprep.subr.mxu0 0.0
    %1204 = vmatpush2.msra.mxu0 0.0
    %1205 = vmatprep.subr.mxu0 0.0
    %1206 = vmatpush2.msra.mxu0 0.0
    %1207 = vmatprep.subr.mxu0 0.0
    %1208 = vmatpush2.msra.mxu0 0.0
    %1209 = vmatprep.subr.mxu0 0.0
    %1210 = vmatpush2.msra.mxu0 0.0
    %1211 = vmatprep.subr.mxu0 0.0
    %1212 = vmatpush2.msra.mxu0 0.0
    %1213 = vmatprep.subr.mxu0 0.0
    %1214 = vmatpush2.msra.mxu0 0.0
    %1215 = vmatprep.mubr.f32.mxu0 0.0
    %1216 = vmatmul.mubr.f32.gmra.mxu0 %v1149
    %v1217 = vpop.f32.mrf.mxu0
    %v1218 = vadd.f32 %v1146, %v1217
    %v1219 = vpop.f32.mrf.mxu0
    %1220 = vdwg.mxu0
    %vm1221 = vcmask 64512
    %1222 = vst.msk [vmem:[#allocation3] sm:$0xff] %vm1221, %v1218
    %1223 = vst.msk [vmem:[#allocation5 - $0x7] sm:$0x80] %vm1134, %v1132
    // Predicated region
    $region42: #{agent_net_forward.1} parent=1 // pred_check
      _
    $region43: #{agent_net_forward.1} parent=1 // pred_check_branch
      %1225 = sbr.rel (0) target = $region45
    $region44: #{agent_net_forward.1} parent=1 // pred_region
      %s1227 = ssub.s32 128, 128
      %1228 = vsyncadd [#allocation4], %s1227
      %s1230 = sshll.u32 [#allocation3], 4
      %s1231 = int_to_ptr.vmem [resolvable:$true] %s1230
      %1233 = dma.vmem_to_hbm [thread:$0]  %s1231, 128, %s10, [#allocation4]
    $region45: #{agent_net_forward.1} parent=1 // pred_fallthru
      _
    // Predicated region
    $region46: #{agent_net_forward.1} parent=1 // pred_check
      _
    $region47: #{agent_net_forward.1} parent=1 // pred_check_branch
      %1235 = sbr.rel (0) target = $region49
    $region48: #{agent_net_forward.1} parent=1 // pred_region
      %s1237 = ssub.s32 16, 16
      %1238 = vsyncadd [#allocation6], %s1237
      %s1240 = sshll.u32 [#allocation5], 4
      %s1241 = int_to_ptr.vmem [resolvable:$true] %s1240
      %1243 = dma.vmem_to_hbm [thread:$0]  %s1241, 16, %s11, [#allocation6]
    $region49: #{agent_net_forward.1} parent=1 // pred_fallthru
      _
    // Predicated region
    $region50: #{agent_net_forward.1} parent=1 // pred_check
      _
    $region51: #{agent_net_forward.1} parent=1 // pred_check_branch
      %1245 = sbr.rel (0) target = $region53
    $region52: #{agent_net_forward.1} parent=1 // pred_region
      %1246 = dma.done [#allocation4], 128
    $region53: #{agent_net_forward.1} parent=1 // pred_fallthru
      _
    // Predicated region
    $region54: #{agent_net_forward.1} parent=1 // pred_check
      _
    $region55: #{agent_net_forward.1} parent=1 // pred_check_branch
      %1248 = sbr.rel (0) target = $region57
    $region56: #{agent_net_forward.1} parent=1 // pred_region
      %1249 = dma.done [#allocation6], 16
    $region57: #{agent_net_forward.1} parent=1 // pred_fallthru
      _
    %1250 = vsyncpa [#allocation4], 1
    %1251 = vsyncpa [#allocation6], 1

</llo_original>
